<compile_context>
chip_gen: v5e
topology: v5e:2x2
jax: 0.10.0
libtpu: 0.0.40
codegen_flags: <defaults>
</compile_context>

<pallas_src>
import functools

import jax
import jax.numpy as jnp
from jax.experimental import pallas as pl
from jax.experimental.pallas import tpu as pltpu

LEAKY_SLOPE = 0.01   # nn.LeakyReLU default negative_slope
BN_EPS = 1e-5        # nn.BatchNorm1d default eps
NEG_INF = -1e30


def _round_up(x, m):
    return ((x + m - 1) // m) * m


# ---------------------------------------------------------------------------
# Fused kernel: projections, attention, 2-pass edge softmax, readout, FC head
# ---------------------------------------------------------------------------
def _fused_kernel(
    e_total,                               # python int (bound by functools.partial)
    # SMEM scalars
    alpha_ref, batt_ref,
    # resident VMEM operands (constant index maps -> fetched once)
    xblk_ref, wblk_ref, bcat_ref,          # block-diag node feats / fused node weights / bias row
    we_ref, be_ref, watt_ref,              # fused edge proj [F_e,2H],[1,2H]; attention row [1,H]
    w1_ref, b1_ref, w2_ref, b2_ref, w3_ref, b3_ref,   # FC head (padded lane-dense)
    # edge-tiled VMEM operands
    ef_ref, src_ref, dst_ref, gid_ref,
    # output
    out_ref,
    # scratch (persists across grid steps)
    hblk_sc, m_sc, l_sc, acc_sc,
):
    f32 = jnp.float32
    H = watt_ref.shape[1]
    TE = ef_ref.shape[0]
    N_pp = hblk_sc.shape[0]
    N_l = m_sc.shape[1]
    N_p = N_pp - N_l
    B = acc_sc.shape[0]

    p = pl.program_id(0)                   # 0: softmax-statistics pass, 1: message/readout pass
    k = pl.program_id(1)                   # edge-tile index
    n_tiles = pl.num_programs(1)

    # ---- one-time init: node projections -> resident block-diag hidden (bf16 MXU operand)
    @pl.when(jnp.logical_and(p == 0, k == 0))
    def _init():
        hblk = jnp.dot(xblk_ref[...], wblk_ref[...], preferred_element_type=f32)
        hblk_sc[...] = hblk.astype(jnp.bfloat16)        # biases added AFTER the gather (exact)
        m_sc[...] = jnp.full((1, N_l), NEG_INF, f32)
        l_sc[...] = jnp.zeros((1, N_l), f32)
        acc_sc[...] = jnp.zeros((B, H), f32)

    # ---- per-tile shared work (both passes need the attention logits) -----------------
    src_col = src_ref[...]                                            # [TE,1] int32
    dst_col = dst_ref[...]                                            # [TE,1] int32
    row_id = jax.lax.broadcasted_iota(jnp.int32, (TE, 1), 0)
    valid = (k * TE + row_id) < e_total                               # padded-edge mask [TE,1]

    # combined src|dst incidence built in-kernel (no [E,N] HBM traffic), bf16 for the MXU
    lane_pp = jax.lax.broadcasted_iota(jnp.int32, (TE, N_pp), 1)
    g2 = jnp.logical_or(lane_pp == src_col, lane_pp == dst_col + N_p)
    g2 = g2.astype(f32).astype(jnp.bfloat16)                          # [TE, N_pp]
    lane_l = jax.lax.broadcasted_iota(jnp.int32, (TE, N_l), 1)
    gdst = (lane_l == dst_col).astype(f32)                            # [TE, N_l] (VPU/XLU masking)

    hblk = hblk_sc[...]                                               # [N_pp, 4H] bf16
    bcat = bcat_ref[...]                                              # [1, 4H]
    he = jnp.dot(ef_ref[...], we_ref[...], preferred_element_type=f32) + be_ref[...]   # [TE,2H]

    # block-diagonal gather of the FIRST projection halves: [src_h1 | dst_h1]
    gat1 = jnp.dot(g2, hblk[:, : 2 * H], preferred_element_type=f32) + bcat[:, : 2 * H]

    # get_weight: w = src + dst + e ; lin_att = PReLU -> Linear(H,1) on VPU + XLU (1-lane output)
    alpha = alpha_ref[0]
    w = gat1[:, :H] + gat1[:, H:] + he[:, :H]
    w = jnp.where(w >= 0, w, alpha * w)
    att = jnp.sum(w * watt_ref[...], axis=-1, keepdims=True) + batt_ref[0]     # [TE,1]
    att = jnp.where(valid, att, NEG_INF)

    # ---- pass 0: online per-destination (ligand) max / exp-sum ------------------------
    @pl.when(p == 0)
    def _stats():
        m_old = m_sc[...]
        tile_max = jnp.max(jnp.where(gdst > 0.0, att, NEG_INF), axis=0, keepdims=True)
        m_new = jnp.maximum(m_old, tile_max)                          # [1, N_l]
        shift = jnp.sum(gdst * m_new, axis=1, keepdims=True)          # [TE,1] per-edge dst max
        ew = jnp.where(valid, jnp.exp(att - shift), 0.0)
        l_sc[...] = l_sc[...] * jnp.exp(m_old - m_new) + \
            jnp.sum(gdst * ew, axis=0, keepdims=True)
        m_sc[...] = m_new

    # ---- pass 1: normalized scores, messages, per-graph readout -----------------------
    @pl.when(p == 1)
    def _messages():
        # second projection halves: [src_h2 | dst_h2]
        gat2 = jnp.dot(g2, hblk[:, 2 * H:], preferred_element_type=f32) + bcat[:, 2 * H:]
        shift = jnp.sum(gdst * m_sc[...], axis=1, keepdims=True)      # [TE,1]
        denom = jnp.sum(gdst * l_sc[...], axis=1, keepdims=True)      # [TE,1]
        ew = jnp.where(valid, jnp.exp(att - shift), 0.0)
        a = ew * pl.reciprocal(denom, approx=True)                    # EUP reciprocal
        msg = jnp.where(valid, (a * he[:, H:]) * (gat2[:, :H] * gat2[:, H:]), 0.0)  # [TE,H]
        # dgl.sum_edges readout: per-graph one-hot built in-kernel, accumulate into [B,H]
        lane_b = jax.lax.broadcasted_iota(jnp.int32, (TE, B), 1)
        ggt = (lane_b == gid_ref[...]).astype(f32)                    # [TE, B]
        acc_sc[...] += jax.lax.dot_general(
            ggt, msg, (((0,), (0,)), ((), ())), preferred_element_type=f32)

    # ---- finalize: FC head (Linear-Dropout(eval)-LeakyReLU-BN(eval) x2 -> Linear) ------
    @pl.when(jnp.logical_and(p == 1, k == n_tiles - 1))
    def _head():
        bn = 1.0 / (1.0 + BN_EPS) ** 0.5    # eval-mode BatchNorm1d with default running stats
        h = jnp.dot(acc_sc[...], w1_ref[...], preferred_element_type=f32) + b1_ref[...]
        h = jnp.where(h >= 0, h, LEAKY_SLOPE * h) * bn
        h = jnp.dot(h, w2_ref[...], preferred_element_type=f32) + b2_ref[...]
        h = jnp.where(h >= 0, h, LEAKY_SLOPE * h) * bn
        out_ref[...] = jnp.dot(h, w3_ref[...], preferred_element_type=f32) + b3_ref[...]


# ---------------------------------------------------------------------------
# Parameters (deterministic init, mirroring nn.Linear default uniform bounds)
# ---------------------------------------------------------------------------
def _linear_params(key, fin, fout):
    k1, k2 = jax.random.split(key)
    bound = 1.0 / (fin ** 0.5)
    w = jax.random.uniform(k1, (fin, fout), jnp.float32, -bound, bound)
    b = jax.random.uniform(k2, (1, fout), jnp.float32, -bound, bound)
    return w, b


def init_params(key, node_feat, edge_feat, hidden, d_fc=200, n_tasks=1):
    ks = jax.random.split(key, 10)
    p = {}
    p["prj_src"] = _linear_params(ks[0], node_feat, hidden)
    p["prj_dst"] = _linear_params(ks[1], node_feat, hidden)
    p["prj_edge"] = _linear_params(ks[2], edge_feat, hidden)
    p["w_src"] = _linear_params(ks[3], node_feat, hidden)
    p["w_dst"] = _linear_params(ks[4], node_feat, hidden)
    p["w_edge"] = _linear_params(ks[5], edge_feat, hidden)
    p["prelu_alpha"] = jnp.full((1, 1), 0.25, jnp.float32)   # nn.PReLU default init
    p["lin_att"] = _linear_params(ks[6], hidden, 1)
    p["fc1"] = _linear_params(ks[7], hidden, d_fc)
    p["fc2"] = _linear_params(ks[8], d_fc, d_fc)
    p["fc3"] = _linear_params(ks[9], d_fc, n_tasks)
    return p


# ---------------------------------------------------------------------------
# Wrapper
# ---------------------------------------------------------------------------
def pocket_ligand_forward(params, xl, xp, ef, src_idx, dst_idx, edge_gid, num_graphs,
                          *, edge_tile=512):
    f32 = jnp.float32
    N_l, F_node = xl.shape
    N_p = xp.shape[0]
    E, F_edge = ef.shape
    B = int(num_graphs)
    H = params["lin_att"][0].shape[0]
    d_fc = params["fc1"][0].shape[1]
    n_tasks = params["fc3"][0].shape[1]
    N_pp = N_p + N_l

    # --- block-diagonal node features & fused projection weights (host-side, tiny) -----
    # hblk columns: [pocket h1 (prj_dst) | ligand h1 (prj_src) | pocket h2 (w_dst) | ligand h2 (w_src)]
    xblk = jnp.zeros((N_pp, 2 * F_node), f32)
    xblk = xblk.at[:N_p, :F_node].set(xp).at[N_p:, F_node:].set(xl)
    wblk = jnp.zeros((2 * F_node, 4 * H), f32)
    wblk = wblk.at[:F_node, 0:H].set(params["prj_dst"][0])
    wblk = wblk.at[:F_node, 2 * H:3 * H].set(params["w_dst"][0])
    wblk = wblk.at[F_node:, H:2 * H].set(params["prj_src"][0])
    wblk = wblk.at[F_node:, 3 * H:4 * H].set(params["w_src"][0])
    bcat = jnp.concatenate([params["prj_dst"][1], params["prj_src"][1],
                            params["w_dst"][1], params["w_src"][1]], axis=1)    # [1,4H]

    we = jnp.concatenate([params["prj_edge"][0], params["w_edge"][0]], axis=1)  # [F_e,2H]
    be = jnp.concatenate([params["prj_edge"][1], params["w_edge"][1]], axis=1)  # [1,2H]
    watt_row = params["lin_att"][0].T                                           # [1,H]
    alpha = params["prelu_alpha"].reshape(1).astype(f32)
    batt = params["lin_att"][1].reshape(1).astype(f32)

    # --- lane-dense FC head (zero padding is mathematically exact) ---------------------
    d_fc_pad = _round_up(d_fc, 128)
    out_pad = _round_up(n_tasks, 128)
    w1, b1 = params["fc1"]
    w2, b2 = params["fc2"]
    w3, b3 = params["fc3"]
    w1p = jnp.pad(w1, ((0, 0), (0, d_fc_pad - d_fc)))
    b1p = jnp.pad(b1, ((0, 0), (0, d_fc_pad - d_fc)))
    w2p = jnp.pad(w2, ((0, d_fc_pad - d_fc), (0, d_fc_pad - d_fc)))
    b2p = jnp.pad(b2, ((0, 0), (0, d_fc_pad - d_fc)))
    w3p = jnp.pad(w3, ((0, d_fc_pad - d_fc), (0, out_pad - n_tasks)))
    b3p = jnp.pad(b3, ((0, 0), (0, out_pad - n_tasks)))

    # --- edge tiling: pad E to a multiple of TE (padded edges masked in-kernel) --------
    TE = _round_up(min(edge_tile, _round_up(E, 8)), 8)
    E_pad = _round_up(E, TE)
    n_tiles = E_pad // TE
    ef_p = jnp.pad(ef.astype(f32), ((0, E_pad - E), (0, 0)))
    src_p = jnp.pad(src_idx.astype(jnp.int32), (0, E_pad - E)).reshape(E_pad, 1)
    dst_p = jnp.pad(dst_idx.astype(jnp.int32), (0, E_pad - E)).reshape(E_pad, 1)
    gid_p = jnp.pad(edge_gid.astype(jnp.int32), (0, E_pad - E)).reshape(E_pad, 1)

    smem = pl.BlockSpec(memory_space=pltpu.MemorySpace.SMEM)

    def full_spec(a):
        return pl.BlockSpec(a.shape, lambda p, k: (0, 0))

    edge_map = lambda p, k: (k, 0)

    resident = (xblk, wblk, bcat, we, be, watt_row, w1p, b1p, w2p, b2p, w3p, b3p)
    inputs = (alpha, batt) + resident + (ef_p, src_p, dst_p, gid_p)
    in_specs = (
        [smem, smem]
        + [full_spec(a) for a in resident]
        + [pl.BlockSpec((TE, F_edge), edge_map),
           pl.BlockSpec((TE, 1), edge_map),
           pl.BlockSpec((TE, 1), edge_map),
           pl.BlockSpec((TE, 1), edge_map)]
    )

    scratch_shapes = [
        pltpu.VMEM((N_pp, 4 * H), jnp.bfloat16),   # resident block-diag hidden
        pltpu.VMEM((1, N_l), jnp.float32),         # per-dst running max
        pltpu.VMEM((1, N_l), jnp.float32),         # per-dst running exp-sum
        pltpu.VMEM((B, H), jnp.float32),           # per-graph readout accumulator
    ]

    # coarse VMEM sizing (raised above the conservative scoped default, capped at v7x physical)
    def _nbytes(a):
        return int(a.size) * a.dtype.itemsize
    est = (2 * sum(_nbytes(a) for a in resident)
           + 2 * (TE * max(F_edge, 128) * 4 + 3 * TE * 128 * 4)
           + N_pp * 4 * H * 2 + (B * H + 2 * 128) * 4
           + TE * (2 * N_pp + 4 * (6 * H + 2 * N_l + 8)))
    vmem_limit = int(min(64 * 1024 * 1024, max(32 * 1024 * 1024, 2 * est)))

    out = pl.pallas_call(
        functools.partial(_fused_kernel, E),
        out_shape=jax.ShapeDtypeStruct((B, out_pad), jnp.float32),
        grid=(2, n_tiles),
        in_specs=in_specs,
        out_specs=pl.BlockSpec((B, out_pad), lambda p, k: (0, 0)),
        scratch_shapes=scratch_shapes,
        compiler_params=pltpu.CompilerParams(
            dimension_semantics=("arbitrary", "arbitrary"),
            vmem_limit_bytes=vmem_limit),
    )(*inputs)
    return out[:, :n_tasks]


# ---------------------------------------------------------------------------
# Pure-JAX reference (for correctness check)
# ---------------------------------------------------------------------------
def reference(params, xl, xp, ef, src_idx, dst_idx, edge_gid, num_graphs):
    def lin(p, x):
        w, b = p
        return x @ w + b

    hl1 = lin(params["prj_src"], xl)
    hp1 = lin(params["prj_dst"], xp)
    ee1 = lin(params["prj_edge"], ef)
    w = hp1[src_idx] + hl1[dst_idx] + ee1
    alpha = params["prelu_alpha"][0, 0]
    w = jnp.where(w >= 0, w, alpha * w)
    w = lin(params["lin_att"], w)                                  # [E, 1]

    N_l = xl.shape[0]
    seg_max = jnp.full((N_l, 1), -1e30, jnp.float32).at[dst_idx].max(w)
    ew = jnp.exp(w - seg_max[dst_idx])
    denom = jnp.zeros((N_l, 1), jnp.float32).at[dst_idx].add(ew)
    a = ew / denom[dst_idx]

    hl2 = lin(params["w_src"], xl)
    hp2 = lin(params["w_dst"], xp)
    ee2 = lin(params["w_edge"], ef)
    l = a * ee2 * hp2[src_idx] * hl2[dst_idx]
    summed = jnp.zeros((num_graphs, l.shape[1]), jnp.float32).at[edge_gid].add(l)

    bn = 1.0 / (1.0 + BN_EPS) ** 0.5
    h = lin(params["fc1"], summed)
    h = jnp.where(h >= 0, h, LEAKY_SLOPE * h) * bn
    h = lin(params["fc2"], h)
    h = jnp.where(h >= 0, h, LEAKY_SLOPE * h) * bn
    return lin(params["fc3"], h)


if __name__ == "__main__":
    node_feat, edge_feat, hidden = 16, 8, 32
    N_l, N_p, E, B = 12, 10, 24, 2

    key = jax.random.PRNGKey(0)
    kparam, kdata = jax.random.split(key)
    params = init_params(kparam, node_feat, edge_feat, hidden)

    k1, k2, k3, k4, k5, k6, k7 = jax.random.split(kdata, 7)
    xl = jax.random.normal(k1, (N_l, node_feat), jnp.float32)
    xp = jax.random.normal(k2, (N_p, node_feat), jnp.float32)
    ef = jax.random.normal(k3, (E, edge_feat), jnp.float32)

    # graph 0: ligand 0..5, pocket 0..4, edges 0..11 ; graph 1: ligand 6..11, pocket 5..9, edges 12..23
    src0 = jax.random.randint(k4, (E // 2,), 0, 5)
    src1 = jax.random.randint(k5, (E // 2,), 5, 10)
    dst0 = jax.random.randint(k6, (E // 2,), 0, 6)
    dst1 = jax.random.randint(k7, (E // 2,), 6, 12)
    src_idx = jnp.concatenate([src0, src1]).astype(jnp.int32)
    dst_idx = jnp.concatenate([dst0, dst1]).astype(jnp.int32)
    edge_gid = jnp.concatenate(
        [jnp.zeros(E // 2, jnp.int32), jnp.ones(E // 2, jnp.int32)]
    )

    # edge_tile=8 -> 3 edge tiles x 2 passes: exercises the tiled/online-softmax grid path
    out = pocket_ligand_forward(params, xl, xp, ef, src_idx, dst_idx, edge_gid, B,
                                edge_tile=8)
    out = jax.block_until_ready(out)

    ref = reference(params, xl, xp, ef, src_idx, dst_idx, edge_gid, B)
    assert out.shape == (B, 1), out.shape
    # bf16 MXU operands on the gather matmuls + approx reciprocal => ~0.5-1% expected deviation
    assert jnp.allclose(out, ref, rtol=3e-2, atol=3e-2), (out, ref)
    print("KERNEL_OK")
</pallas_src>

<mosaic_0001>
module attributes {stable_mosaic.version = 11 : i64} {
  func.func @_fused_kernel(%arg0: i32, %arg1: i32, %arg2: memref<1xf32, #tpu.memory_space<smem>>, %arg3: memref<1xf32, #tpu.memory_space<smem>>, %arg4: memref<22x32xf32, #tpu.memory_space<vmem>>, %arg5: memref<32x128xf32, #tpu.memory_space<vmem>>, %arg6: memref<1x128xf32, #tpu.memory_space<vmem>>, %arg7: memref<8x64xf32, #tpu.memory_space<vmem>>, %arg8: memref<1x64xf32, #tpu.memory_space<vmem>>, %arg9: memref<1x32xf32, #tpu.memory_space<vmem>>, %arg10: memref<32x256xf32, #tpu.memory_space<vmem>>, %arg11: memref<1x256xf32, #tpu.memory_space<vmem>>, %arg12: memref<256x256xf32, #tpu.memory_space<vmem>>, %arg13: memref<1x256xf32, #tpu.memory_space<vmem>>, %arg14: memref<256x128xf32, #tpu.memory_space<vmem>>, %arg15: memref<1x128xf32, #tpu.memory_space<vmem>>, %arg16: memref<8x8xf32, #tpu.memory_space<vmem>>, %arg17: memref<8x1xi32, #tpu.memory_space<vmem>>, %arg18: memref<8x1xi32, #tpu.memory_space<vmem>>, %arg19: memref<8x1xi32, #tpu.memory_space<vmem>>, %arg20: memref<2x128xf32, #tpu.memory_space<vmem>>, %arg21: memref<22x128xbf16, #tpu.memory_space<vmem>>, %arg22: memref<1x12xf32, #tpu.memory_space<vmem>>, %arg23: memref<1x12xf32, #tpu.memory_space<vmem>>, %arg24: memref<2x32xf32, #tpu.memory_space<vmem>>) attributes {dimension_semantics = [#tpu.dimension_semantics<arbitrary>, #tpu.dimension_semantics<arbitrary>], iteration_bounds = array<i64: 2, 3>, scalar_prefetch = 0 : i64, scratch_operands = 4 : i64, tpu.core_type = #tpu.core_type<tc>, window_params = [{transform_indices = @transform_0, window_bounds = array<i64: 1>}, {transform_indices = @transform_1, window_bounds = array<i64: 1>}, {pipeline_mode = #tpu.pipeline_mode<synchronous>, transform_indices = @transform_2, window_bounds = array<i64: 22, 32>}, {pipeline_mode = #tpu.pipeline_mode<synchronous>, transform_indices = @transform_3, window_bounds = array<i64: 32, 128>}, {pipeline_mode = #tpu.pipeline_mode<synchronous>, transform_indices = @transform_4, window_bounds = array<i64: 1, 128>}, {pipeline_mode = #tpu.pipeline_mode<synchronous>, transform_indices = @transform_5, window_bounds = array<i64: 8, 64>}, {pipeline_mode = #tpu.pipeline_mode<synchronous>, transform_indices = @transform_6, window_bounds = array<i64: 1, 64>}, {pipeline_mode = #tpu.pipeline_mode<synchronous>, transform_indices = @transform_7, window_bounds = array<i64: 1, 32>}, {pipeline_mode = #tpu.pipeline_mode<synchronous>, transform_indices = @transform_8, window_bounds = array<i64: 32, 256>}, {pipeline_mode = #tpu.pipeline_mode<synchronous>, transform_indices = @transform_9, window_bounds = array<i64: 1, 256>}, {pipeline_mode = #tpu.pipeline_mode<synchronous>, transform_indices = @transform_10, window_bounds = array<i64: 256, 256>}, {pipeline_mode = #tpu.pipeline_mode<synchronous>, transform_indices = @transform_11, window_bounds = array<i64: 1, 256>}, {pipeline_mode = #tpu.pipeline_mode<synchronous>, transform_indices = @transform_12, window_bounds = array<i64: 256, 128>}, {pipeline_mode = #tpu.pipeline_mode<synchronous>, transform_indices = @transform_13, window_bounds = array<i64: 1, 128>}, {transform_indices = @transform_14, window_bounds = array<i64: 8, 8>}, {transform_indices = @transform_15, window_bounds = array<i64: 8, 1>}, {transform_indices = @transform_16, window_bounds = array<i64: 8, 1>}, {transform_indices = @transform_17, window_bounds = array<i64: 8, 1>}, {pipeline_mode = #tpu.pipeline_mode<synchronous>, transform_indices = @transform_18, window_bounds = array<i64: 2, 128>}]} {
    %c0_i32 = arith.constant 0 : i32
    %0 = arith.cmpi eq, %arg0, %c0_i32 : i32
    %c0_i32_0 = arith.constant 0 : i32
    %1 = arith.cmpi eq, %arg1, %c0_i32_0 : i32
    %2 = arith.andi %0, %1 : i1
    %3 = arith.extui %2 : i1 to i32
    %c0_i32_1 = arith.constant 0 : i32
    %4 = arith.cmpi ne, %3, %c0_i32_1 : i32
    scf.if %4 {
      %c0_28 = arith.constant 0 : index
      %c0_29 = arith.constant 0 : index
      %74 = vector.load %arg4[%c0_28, %c0_29] : memref<22x32xf32, #tpu.memory_space<vmem>>, vector<22x32xf32>
      %c0_30 = arith.constant 0 : index
      %c0_31 = arith.constant 0 : index
      %75 = vector.load %arg5[%c0_30, %c0_31] : memref<32x128xf32, #tpu.memory_space<vmem>>, vector<32x128xf32>
      %cst_32 = arith.constant dense<0.000000e+00> : vector<22x128xf32>
      %76 = tpu.matmul %74, %75, %cst_32 {dimension_numbers = #tpu.dot_dimension_numbers<[1], [0], [0], [1], [0, 0, 1, 1], [], []>} : vector<22x32xf32>, vector<32x128xf32>, vector<22x128xf32> -> vector<22x128xf32>
      %77 = arith.truncf %76 : vector<22x128xf32> to vector<22x128xbf16>
      %c0_33 = arith.constant 0 : index
      %c0_34 = arith.constant 0 : index
      %78 = vector.load %arg21[%c0_33, %c0_34] : memref<22x128xbf16, #tpu.memory_space<vmem>>, vector<22x128xbf16>
      tpu.vector_store %arg21[%c0_33, %c0_34], %77 {strides = array<i32>} : memref<22x128xbf16, #tpu.memory_space<vmem>>, vector<22x128xbf16>,
      %cst_35 = arith.constant -1.000000e+30 : f32
      %79 = vector.broadcast %cst_35 : f32 to vector<1x12xf32>
      %c0_36 = arith.constant 0 : index
      %c0_37 = arith.constant 0 : index
      %80 = vector.load %arg22[%c0_36, %c0_37] : memref<1x12xf32, #tpu.memory_space<vmem>>, vector<1x12xf32>
      tpu.vector_store %arg22[%c0_36, %c0_37], %79 {strides = array<i32>} : memref<1x12xf32, #tpu.memory_space<vmem>>, vector<1x12xf32>,
      %cst_38 = arith.constant 0.000000e+00 : f32
      %81 = vector.broadcast %cst_38 : f32 to vector<1x12xf32>
      %c0_39 = arith.constant 0 : index
      %c0_40 = arith.constant 0 : index
      %82 = vector.load %arg23[%c0_39, %c0_40] : memref<1x12xf32, #tpu.memory_space<vmem>>, vector<1x12xf32>
      tpu.vector_store %arg23[%c0_39, %c0_40], %81 {strides = array<i32>} : memref<1x12xf32, #tpu.memory_space<vmem>>, vector<1x12xf32>,
      %cst_41 = arith.constant 0.000000e+00 : f32
      %83 = vector.broadcast %cst_41 : f32 to vector<2x32xf32>
      %c0_42 = arith.constant 0 : index
      %c0_43 = arith.constant 0 : index
      %84 = vector.load %arg24[%c0_42, %c0_43] : memref<2x32xf32, #tpu.memory_space<vmem>>, vector<2x32xf32>
      tpu.vector_store %arg24[%c0_42, %c0_43], %83 {strides = array<i32>} : memref<2x32xf32, #tpu.memory_space<vmem>>, vector<2x32xf32>,
    } else {
    }
    %c0 = arith.constant 0 : index
    %c0_2 = arith.constant 0 : index
    %5 = vector.load %arg17[%c0, %c0_2] : memref<8x1xi32, #tpu.memory_space<vmem>>, vector<8x1xi32>
    %c0_3 = arith.constant 0 : index
    %c0_4 = arith.constant 0 : index
    %6 = vector.load %arg18[%c0_3, %c0_4] : memref<8x1xi32, #tpu.memory_space<vmem>>, vector<8x1xi32>
    %7 = tpu.iota {dimensions = array<i32: 0>} : vector<8x1xi32>
    %c8_i32 = arith.constant 8 : i32
    %8 = arith.muli %arg1, %c8_i32 : i32
    %9 = vector.broadcast %8 : i32 to vector<8x1xi32>
    %10 = arith.addi %9, %7 : vector<8x1xi32>
    %c24_i32 = arith.constant 24 : i32
    %11 = vector.broadcast %c24_i32 : i32 to vector<8x1xi32>
    %12 = arith.cmpi slt, %10, %11 : vector<8x1xi32>
    %13 = tpu.iota {dimensions = array<i32: 1>} : vector<8x22xi32>
    %14 = vector.broadcast %5 : vector<8x1xi32> to vector<8x22xi32>
    %15 = arith.cmpi eq, %13, %14 : vector<8x22xi32>
    %c10_i32 = arith.constant 10 : i32
    %16 = vector.broadcast %c10_i32 : i32 to vector<8x1xi32>
    %17 = arith.addi %6, %16 : vector<8x1xi32>
    %18 = vector.broadcast %17 : vector<8x1xi32> to vector<8x22xi32>
    %19 = arith.cmpi eq, %13, %18 : vector<8x22xi32>
    %20 = arith.ori %15, %19 : vector<8x22xi1>
    %21 = arith.extui %20 : vector<8x22xi1> to vector<8x22xi32>
    %22 = arith.sitofp %21 : vector<8x22xi32> to vector<8x22xf32>
    %23 = arith.truncf %22 : vector<8x22xf32> to vector<8x22xbf16>
    %24 = tpu.iota {dimensions = array<i32: 1>} : vector<8x12xi32>
    %25 = vector.broadcast %6 : vector<8x1xi32> to vector<8x12xi32>
    %26 = arith.cmpi eq, %24, %25 : vector<8x12xi32>
    %27 = arith.extui %26 : vector<8x12xi1> to vector<8x12xi32>
    %28 = arith.sitofp %27 : vector<8x12xi32> to vector<8x12xf32>
    %c0_5 = arith.constant 0 : index
    %c0_6 = arith.constant 0 : index
    %29 = vector.load %arg21[%c0_5, %c0_6] : memref<22x128xbf16, #tpu.memory_space<vmem>>, vector<22x128xbf16>
    %c0_7 = arith.constant 0 : index
    %c0_8 = arith.constant 0 : index
    %30 = vector.load %arg6[%c0_7, %c0_8] : memref<1x128xf32, #tpu.memory_space<vmem>>, vector<1x128xf32>
    %c0_9 = arith.constant 0 : index
    %c0_10 = arith.constant 0 : index
    %31 = vector.load %arg16[%c0_9, %c0_10] : memref<8x8xf32, #tpu.memory_space<vmem>>, vector<8x8xf32>
    %c0_11 = arith.constant 0 : index
    %c0_12 = arith.constant 0 : index
    %32 = vector.load %arg7[%c0_11, %c0_12] : memref<8x64xf32, #tpu.memory_space<vmem>>, vector<8x64xf32>
    %cst = arith.constant dense<0.000000e+00> : vector<8x64xf32>
    %33 = tpu.matmul %31, %32, %cst {dimension_numbers = #tpu.dot_dimension_numbers<[1], [0], [0], [1], [0, 0, 1, 1], [], []>} : vector<8x8xf32>, vector<8x64xf32>, vector<8x64xf32> -> vector<8x64xf32>
    %c0_13 = arith.constant 0 : index
    %c0_14 = arith.constant 0 : index
    %34 = vector.load %arg8[%c0_13, %c0_14] : memref<1x64xf32, #tpu.memory_space<vmem>>, vector<1x64xf32>
    %35 = vector.broadcast %34 : vector<1x64xf32> to vector<8x64xf32>
    %36 = arith.addf %33, %35 : vector<8x64xf32>
    %37 = vector.extract_strided_slice %29 {offsets = [0, 0], sizes = [22, 64], strides = [1, 1]} : vector<22x128xbf16> to vector<22x64xbf16>
    %cst_15 = arith.constant dense<0.000000e+00> : vector<8x64xf32>
    %38 = tpu.matmul %23, %37, %cst_15 {dimension_numbers = #tpu.dot_dimension_numbers<[1], [0], [0], [1], [0, 0, 1, 1], [], []>} : vector<8x22xbf16>, vector<22x64xbf16>, vector<8x64xf32> -> vector<8x64xf32>
    %39 = vector.extract_strided_slice %30 {offsets = [0, 0], sizes = [1, 64], strides = [1, 1]} : vector<1x128xf32> to vector<1x64xf32>
    %40 = vector.broadcast %39 : vector<1x64xf32> to vector<8x64xf32>
    %41 = arith.addf %38, %40 : vector<8x64xf32>
    %c0_16 = arith.constant 0 : index
    %42 = memref.load %arg2[%c0_16] : memref<1xf32, #tpu.memory_space<smem>>
    %43 = vector.extract_strided_slice %41 {offsets = [0, 0], sizes = [8, 32], strides = [1, 1]} : vector<8x64xf32> to vector<8x32xf32>
    %44 = vector.extract_strided_slice %41 {offsets = [0, 32], sizes = [8, 32], strides = [1, 1]} : vector<8x64xf32> to vector<8x32xf32>
    %45 = arith.addf %43, %44 : vector<8x32xf32>
    %46 = vector.extract_strided_slice %36 {offsets = [0, 0], sizes = [8, 32], strides = [1, 1]} : vector<8x64xf32> to vector<8x32xf32>
    %47 = arith.addf %45, %46 : vector<8x32xf32>
    %cst_17 = arith.constant 0.000000e+00 : f32
    %48 = vector.broadcast %cst_17 : f32 to vector<8x32xf32>
    %49 = arith.cmpf oge, %47, %48 : vector<8x32xf32>
    %50 = vector.broadcast %42 : f32 to vector<8x32xf32>
    %51 = arith.mulf %50, %47 : vector<8x32xf32>
    %52 = arith.select %49, %47, %51 : vector<8x32xi1>, vector<8x32xf32>
    %c0_18 = arith.constant 0 : index
    %c0_19 = arith.constant 0 : index
    %53 = vector.load %arg9[%c0_18, %c0_19] : memref<1x32xf32, #tpu.memory_space<vmem>>, vector<1x32xf32>
    %54 = vector.broadcast %53 : vector<1x32xf32> to vector<8x32xf32>
    %55 = arith.mulf %52, %54 : vector<8x32xf32>
    %cst_20 = arith.constant dense<0.000000e+00> : vector<8xf32>
    %56 = vector.multi_reduction <add>, %55, %cst_20 [1] : vector<8x32xf32> to vector<8xf32>
    %57 = vector.shape_cast %56 : vector<8xf32> to vector<8x1xf32>
    %c0_21 = arith.constant 0 : index
    %58 = memref.load %arg3[%c0_21] : memref<1xf32, #tpu.memory_space<smem>>
    %59 = vector.broadcast %58 : f32 to vector<8x1xf32>
    %60 = arith.addf %57, %59 : vector<8x1xf32>
    %cst_22 = arith.constant -1.000000e+30 : f32
    %61 = vector.broadcast %cst_22 : f32 to vector<8x1xf32>
    %62 = arith.select %12, %60, %61 : vector<8x1xi1>, vector<8x1xf32>
    %c0_i32_23 = arith.constant 0 : i32
    %63 = arith.cmpi eq, %arg0, %c0_i32_23 : i32
    %64 = arith.extui %63 : i1 to i32
    %c0_i32_24 = arith.constant 0 : i32
    %65 = arith.cmpi ne, %64, %c0_i32_24 : i32
    scf.if %65 {
      %c0_28 = arith.constant 0 : index
      %c0_29 = arith.constant 0 : index
      %74 = vector.load %arg22[%c0_28, %c0_29] : memref<1x12xf32, #tpu.memory_space<vmem>>, vector<1x12xf32>
      %cst_30 = arith.constant 0.000000e+00 : f32
      %75 = vector.broadcast %cst_30 : f32 to vector<8x12xf32>
      %76 = arith.cmpf ogt, %28, %75 : vector<8x12xf32>
      %cst_31 = arith.constant -1.000000e+30 : f32
      %77 = vector.shape_cast %62 : vector<8x1xf32> to vector<8x1xf32>
      %78 = vector.broadcast %77 : vector<8x1xf32> to vector<8x12xf32>
      %79 = vector.broadcast %cst_31 : f32 to vector<8x12xf32>
      %80 = arith.select %76, %78, %79 : vector<8x12xi1>, vector<8x12xf32>
      %cst_32 = arith.constant dense<0xFF800000> : vector<12xf32>
      %81 = vector.multi_reduction <maximumf>, %80, %cst_32 [0] : vector<8x12xf32> to vector<12xf32>
      %82 = vector.shape_cast %81 : vector<12xf32> to vector<1x12xf32>
      %83 = arith.maximumf %74, %82 : vector<1x12xf32>
      %84 = vector.broadcast %83 : vector<1x12xf32> to vector<8x12xf32>
      %85 = arith.mulf %28, %84 : vector<8x12xf32>
      %cst_33 = arith.constant dense<0.000000e+00> : vector<8xf32>
      %86 = vector.multi_reduction <add>, %85, %cst_33 [1] : vector<8x12xf32> to vector<8xf32>
      %87 = vector.shape_cast %86 : vector<8xf32> to vector<8x1xf32>
      %88 = arith.subf %62, %87 : vector<8x1xf32>
      %89 = math.exp %88 : vector<8x1xf32>
      %cst_34 = arith.constant 0.000000e+00 : f32
      %90 = vector.broadcast %cst_34 : f32 to vector<8x1xf32>
      %91 = arith.select %12, %89, %90 : vector<8x1xi1>, vector<8x1xf32>
      %c0_35 = arith.constant 0 : index
      %c0_36 = arith.constant 0 : index
      %92 = vector.load %arg23[%c0_35, %c0_36] : memref<1x12xf32, #tpu.memory_space<vmem>>, vector<1x12xf32>
      %93 = arith.subf %74, %83 : vector<1x12xf32>
      %94 = math.exp %93 : vector<1x12xf32>
      %95 = arith.mulf %92, %94 : vector<1x12xf32>
      %96 = vector.broadcast %91 : vector<8x1xf32> to vector<8x12xf32>
      %97 = arith.mulf %28, %96 : vector<8x12xf32>
      %cst_37 = arith.constant dense<0.000000e+00> : vector<12xf32>
      %98 = vector.multi_reduction <add>, %97, %cst_37 [0] : vector<8x12xf32> to vector<12xf32>
      %99 = vector.shape_cast %98 : vector<12xf32> to vector<1x12xf32>
      %100 = arith.addf %95, %99 : vector<1x12xf32>
      %c0_38 = arith.constant 0 : index
      %c0_39 = arith.constant 0 : index
      %101 = vector.load %arg23[%c0_38, %c0_39] : memref<1x12xf32, #tpu.memory_space<vmem>>, vector<1x12xf32>
      tpu.vector_store %arg23[%c0_38, %c0_39], %100 {strides = array<i32>} : memref<1x12xf32, #tpu.memory_space<vmem>>, vector<1x12xf32>,
      %c0_40 = arith.constant 0 : index
      %c0_41 = arith.constant 0 : index
      %102 = vector.load %arg22[%c0_40, %c0_41] : memref<1x12xf32, #tpu.memory_space<vmem>>, vector<1x12xf32>
      tpu.vector_store %arg22[%c0_40, %c0_41], %83 {strides = array<i32>} : memref<1x12xf32, #tpu.memory_space<vmem>>, vector<1x12xf32>,
    } else {
    }
    %c1_i32 = arith.constant 1 : i32
    %66 = arith.cmpi eq, %arg0, %c1_i32 : i32
    %67 = arith.extui %66 : i1 to i32
    %c0_i32_25 = arith.constant 0 : i32
    %68 = arith.cmpi ne, %67, %c0_i32_25 : i32
    scf.if %68 {
      %74 = vector.extract_strided_slice %29 {offsets = [0, 64], sizes = [22, 64], strides = [1, 1]} : vector<22x128xbf16> to vector<22x64xbf16>
      %cst_28 = arith.constant dense<0.000000e+00> : vector<8x64xf32>
      %75 = tpu.matmul %23, %74, %cst_28 {dimension_numbers = #tpu.dot_dimension_numbers<[1], [0], [0], [1], [0, 0, 1, 1], [], []>} : vector<8x22xbf16>, vector<22x64xbf16>, vector<8x64xf32> -> vector<8x64xf32>
      %76 = vector.extract_strided_slice %30 {offsets = [0, 64], sizes = [1, 64], strides = [1, 1]} : vector<1x128xf32> to vector<1x64xf32>
      %77 = vector.broadcast %76 : vector<1x64xf32> to vector<8x64xf32>
      %78 = arith.addf %75, %77 : vector<8x64xf32>
      %c0_29 = arith.constant 0 : index
      %c0_30 = arith.constant 0 : index
      %79 = vector.load %arg22[%c0_29, %c0_30] : memref<1x12xf32, #tpu.memory_space<vmem>>, vector<1x12xf32>
      %80 = vector.broadcast %79 : vector<1x12xf32> to vector<8x12xf32>
      %81 = arith.mulf %28, %80 : vector<8x12xf32>
      %cst_31 = arith.constant dense<0.000000e+00> : vector<8xf32>
      %82 = vector.multi_reduction <add>, %81, %cst_31 [1] : vector<8x12xf32> to vector<8xf32>
      %83 = vector.shape_cast %82 : vector<8xf32> to vector<8x1xf32>
      %c0_32 = arith.constant 0 : index
      %c0_33 = arith.constant 0 : index
      %84 = vector.load %arg23[%c0_32, %c0_33] : memref<1x12xf32, #tpu.memory_space<vmem>>, vector<1x12xf32>
      %85 = vector.broadcast %84 : vector<1x12xf32> to vector<8x12xf32>
      %86 = arith.mulf %28, %85 : vector<8x12xf32>
      %cst_34 = arith.constant dense<0.000000e+00> : vector<8xf32>
      %87 = vector.multi_reduction <add>, %86, %cst_34 [1] : vector<8x12xf32> to vector<8xf32>
      %88 = vector.shape_cast %87 : vector<8xf32> to vector<8x1xf32>
      %89 = arith.subf %62, %83 : vector<8x1xf32>
      %90 = math.exp %89 : vector<8x1xf32>
      %cst_35 = arith.constant 0.000000e+00 : f32
      %91 = vector.broadcast %cst_35 : f32 to vector<8x1xf32>
      %92 = arith.select %12, %90, %91 : vector<8x1xi1>, vector<8x1xf32>
      %93 = tpu.reciprocal %88 {approx = true} : vector<8x1xf32> -> vector<8x1xf32>
      %94 = arith.mulf %92, %93 : vector<8x1xf32>
      %95 = vector.extract_strided_slice %36 {offsets = [0, 32], sizes = [8, 32], strides = [1, 1]} : vector<8x64xf32> to vector<8x32xf32>
      %96 = vector.broadcast %94 : vector<8x1xf32> to vector<8x32xf32>
      %97 = arith.mulf %96, %95 : vector<8x32xf32>
      %98 = vector.extract_strided_slice %78 {offsets = [0, 0], sizes = [8, 32], strides = [1, 1]} : vector<8x64xf32> to vector<8x32xf32>
      %99 = vector.extract_strided_slice %78 {offsets = [0, 32], sizes = [8, 32], strides = [1, 1]} : vector<8x64xf32> to vector<8x32xf32>
      %100 = arith.mulf %98, %99 : vector<8x32xf32>
      %101 = arith.mulf %97, %100 : vector<8x32xf32>
      %cst_36 = arith.constant 0.000000e+00 : f32
      %102 = vector.shape_cast %12 : vector<8x1xi1> to vector<8x1xi1>
      %103 = vector.broadcast %102 : vector<8x1xi1> to vector<8x32xi1>
      %104 = vector.broadcast %cst_36 : f32 to vector<8x32xf32>
      %105 = arith.select %103, %101, %104 : vector<8x32xi1>, vector<8x32xf32>
      %106 = tpu.iota {dimensions = array<i32: 1>} : vector<8x2xi32>
      %c0_37 = arith.constant 0 : index
      %c0_38 = arith.constant 0 : index
      %107 = vector.load %arg19[%c0_37, %c0_38] : memref<8x1xi32, #tpu.memory_space<vmem>>, vector<8x1xi32>
      %108 = vector.broadcast %107 : vector<8x1xi32> to vector<8x2xi32>
      %109 = arith.cmpi eq, %106, %108 : vector<8x2xi32>
      %110 = arith.extui %109 : vector<8x2xi1> to vector<8x2xi32>
      %111 = arith.sitofp %110 : vector<8x2xi32> to vector<8x2xf32>
      %c0_39 = arith.constant 0 : index
      %c0_40 = arith.constant 0 : index
      %112 = vector.load %arg24[%c0_39, %c0_40] : memref<2x32xf32, #tpu.memory_space<vmem>>, vector<2x32xf32>
      %cst_41 = arith.constant dense<0.000000e+00> : vector<2x32xf32>
      %113 = tpu.matmul %111, %105, %cst_41 {dimension_numbers = #tpu.dot_dimension_numbers<[0], [0], [1], [1], [0, 1, 1, 1], [], []>} : vector<8x2xf32>, vector<8x32xf32>, vector<2x32xf32> -> vector<2x32xf32>
      %114 = arith.addf %112, %113 : vector<2x32xf32>
      %c0_42 = arith.constant 0 : index
      %c0_43 = arith.constant 0 : index
      %115 = vector.load %arg24[%c0_42, %c0_43] : memref<2x32xf32, #tpu.memory_space<vmem>>, vector<2x32xf32>
      tpu.vector_store %arg24[%c0_42, %c0_43], %114 {strides = array<i32>} : memref<2x32xf32, #tpu.memory_space<vmem>>, vector<2x32xf32>,
    } else {
    }
    %c1_i32_26 = arith.constant 1 : i32
    %69 = arith.cmpi eq, %arg0, %c1_i32_26 : i32
    %c2_i32 = arith.constant 2 : i32
    %70 = arith.cmpi eq, %arg1, %c2_i32 : i32
    %71 = arith.andi %69, %70 : i1
    %72 = arith.extui %71 : i1 to i32
    %c0_i32_27 = arith.constant 0 : i32
    %73 = arith.cmpi ne, %72, %c0_i32_27 : i32
    scf.if %73 {
      %c0_28 = arith.constant 0 : index
      %c0_29 = arith.constant 0 : index
      %74 = vector.load %arg24[%c0_28, %c0_29] : memref<2x32xf32, #tpu.memory_space<vmem>>, vector<2x32xf32>
      %c0_30 = arith.constant 0 : index
      %c0_31 = arith.constant 0 : index
      %75 = vector.load %arg10[%c0_30, %c0_31] : memref<32x256xf32, #tpu.memory_space<vmem>>, vector<32x256xf32>
      %cst_32 = arith.constant dense<0.000000e+00> : vector<2x256xf32>
      %76 = tpu.matmul %74, %75, %cst_32 {dimension_numbers = #tpu.dot_dimension_numbers<[1], [0], [0], [1], [0, 0, 1, 1], [], []>} : vector<2x32xf32>, vector<32x256xf32>, vector<2x256xf32> -> vector<2x256xf32>
      %c0_33 = arith.constant 0 : index
      %c0_34 = arith.constant 0 : index
      %77 = vector.load %arg11[%c0_33, %c0_34] : memref<1x256xf32, #tpu.memory_space<vmem>>, vector<1x256xf32>
      %78 = vector.broadcast %77 : vector<1x256xf32> to vector<2x256xf32>
      %79 = arith.addf %76, %78 : vector<2x256xf32>
      %cst_35 = arith.constant 0.000000e+00 : f32
      %80 = vector.broadcast %cst_35 : f32 to vector<2x256xf32>
      %81 = arith.cmpf oge, %79, %80 : vector<2x256xf32>
      %cst_36 = arith.constant 0.00999999977 : f32
      %82 = vector.broadcast %cst_36 : f32 to vector<2x256xf32>
      %83 = arith.mulf %82, %79 : vector<2x256xf32>
      %84 = arith.select %81, %79, %83 : vector<2x256xi1>, vector<2x256xf32>
      %cst_37 = arith.constant 0.999994993 : f32
      %85 = vector.broadcast %cst_37 : f32 to vector<2x256xf32>
      %86 = arith.mulf %84, %85 : vector<2x256xf32>
      %c0_38 = arith.constant 0 : index
      %c0_39 = arith.constant 0 : index
      %87 = vector.load %arg12[%c0_38, %c0_39] : memref<256x256xf32, #tpu.memory_space<vmem>>, vector<256x256xf32>
      %cst_40 = arith.constant dense<0.000000e+00> : vector<2x256xf32>
      %88 = tpu.matmul %86, %87, %cst_40 {dimension_numbers = #tpu.dot_dimension_numbers<[1], [0], [0], [1], [0, 0, 1, 1], [], []>} : vector<2x256xf32>, vector<256x256xf32>, vector<2x256xf32> -> vector<2x256xf32>
      %c0_41 = arith.constant 0 : index
      %c0_42 = arith.constant 0 : index
      %89 = vector.load %arg13[%c0_41, %c0_42] : memref<1x256xf32, #tpu.memory_space<vmem>>, vector<1x256xf32>
      %90 = vector.broadcast %89 : vector<1x256xf32> to vector<2x256xf32>
      %91 = arith.addf %88, %90 : vector<2x256xf32>
      %cst_43 = arith.constant 0.000000e+00 : f32
      %92 = vector.broadcast %cst_43 : f32 to vector<2x256xf32>
      %93 = arith.cmpf oge, %91, %92 : vector<2x256xf32>
      %cst_44 = arith.constant 0.00999999977 : f32
      %94 = vector.broadcast %cst_44 : f32 to vector<2x256xf32>
      %95 = arith.mulf %94, %91 : vector<2x256xf32>
      %96 = arith.select %93, %91, %95 : vector<2x256xi1>, vector<2x256xf32>
      %cst_45 = arith.constant 0.999994993 : f32
      %97 = vector.broadcast %cst_45 : f32 to vector<2x256xf32>
      %98 = arith.mulf %96, %97 : vector<2x256xf32>
      %c0_46 = arith.constant 0 : index
      %c0_47 = arith.constant 0 : index
      %99 = vector.load %arg14[%c0_46, %c0_47] : memref<256x128xf32, #tpu.memory_space<vmem>>, vector<256x128xf32>
      %cst_48 = arith.constant dense<0.000000e+00> : vector<2x128xf32>
      %100 = tpu.matmul %98, %99, %cst_48 {dimension_numbers = #tpu.dot_dimension_numbers<[1], [0], [0], [1], [0, 0, 1, 1], [], []>} : vector<2x256xf32>, vector<256x128xf32>, vector<2x128xf32> -> vector<2x128xf32>
      %c0_49 = arith.constant 0 : index
      %c0_50 = arith.constant 0 : index
      %101 = vector.load %arg15[%c0_49, %c0_50] : memref<1x128xf32, #tpu.memory_space<vmem>>, vector<1x128xf32>
      %102 = vector.broadcast %101 : vector<1x128xf32> to vector<2x128xf32>
      %103 = arith.addf %100, %102 : vector<2x128xf32>
      %c0_51 = arith.constant 0 : index
      %c0_52 = arith.constant 0 : index
      %104 = vector.load %arg20[%c0_51, %c0_52] : memref<2x128xf32, #tpu.memory_space<vmem>>, vector<2x128xf32>
      tpu.vector_store %arg20[%c0_51, %c0_52], %103 {strides = array<i32>} : memref<2x128xf32, #tpu.memory_space<vmem>>, vector<2x128xf32>,
    } else {
    }
    return
  }
  func.func @transform_0(%arg0: i32, %arg1: i32) -> i32 {
    %c0_i32 = arith.constant 0 : i32
    %c0_i32_0 = arith.constant 0 : i32
    return %c0_i32 : i32
  }
  func.func @transform_1(%arg0: i32, %arg1: i32) -> i32 {
    %c0_i32 = arith.constant 0 : i32
    %c0_i32_0 = arith.constant 0 : i32
    return %c0_i32 : i32
  }
  func.func @transform_2(%arg0: i32, %arg1: i32) -> (i32, i32) {
    %c0_i32 = arith.constant 0 : i32
    %c0_i32_0 = arith.constant 0 : i32
    %c0_i32_1 = arith.constant 0 : i32
    return %c0_i32, %c0_i32_0 : i32, i32
  }
  func.func @transform_3(%arg0: i32, %arg1: i32) -> (i32, i32) {
    %c0_i32 = arith.constant 0 : i32
    %c0_i32_0 = arith.constant 0 : i32
    %c0_i32_1 = arith.constant 0 : i32
    return %c0_i32, %c0_i32_0 : i32, i32
  }
  func.func @transform_4(%arg0: i32, %arg1: i32) -> (i32, i32) {
    %c0_i32 = arith.constant 0 : i32
    %c0_i32_0 = arith.constant 0 : i32
    %c0_i32_1 = arith.constant 0 : i32
    return %c0_i32, %c0_i32_0 : i32, i32
  }
  func.func @transform_5(%arg0: i32, %arg1: i32) -> (i32, i32) {
    %c0_i32 = arith.constant 0 : i32
    %c0_i32_0 = arith.constant 0 : i32
    %c0_i32_1 = arith.constant 0 : i32
    return %c0_i32, %c0_i32_0 : i32, i32
  }
  func.func @transform_6(%arg0: i32, %arg1: i32) -> (i32, i32) {
    %c0_i32 = arith.constant 0 : i32
    %c0_i32_0 = arith.constant 0 : i32
    %c0_i32_1 = arith.constant 0 : i32
    return %c0_i32, %c0_i32_0 : i32, i32
  }
  func.func @transform_7(%arg0: i32, %arg1: i32) -> (i32, i32) {
    %c0_i32 = arith.constant 0 : i32
    %c0_i32_0 = arith.constant 0 : i32
    %c0_i32_1 = arith.constant 0 : i32
    return %c0_i32, %c0_i32_0 : i32, i32
  }
  func.func @transform_8(%arg0: i32, %arg1: i32) -> (i32, i32) {
    %c0_i32 = arith.constant 0 : i32
    %c0_i32_0 = arith.constant 0 : i32
    %c0_i32_1 = arith.constant 0 : i32
    return %c0_i32, %c0_i32_0 : i32, i32
  }
  func.func @transform_9(%arg0: i32, %arg1: i32) -> (i32, i32) {
    %c0_i32 = arith.constant 0 : i32
    %c0_i32_0 = arith.constant 0 : i32
    %c0_i32_1 = arith.constant 0 : i32
    return %c0_i32, %c0_i32_0 : i32, i32
  }
  func.func @transform_10(%arg0: i32, %arg1: i32) -> (i32, i32) {
    %c0_i32 = arith.constant 0 : i32
    %c0_i32_0 = arith.constant 0 : i32
    %c0_i32_1 = arith.constant 0 : i32
    return %c0_i32, %c0_i32_0 : i32, i32
  }
  func.func @transform_11(%arg0: i32, %arg1: i32) -> (i32, i32) {
    %c0_i32 = arith.constant 0 : i32
    %c0_i32_0 = arith.constant 0 : i32
    %c0_i32_1 = arith.constant 0 : i32
    return %c0_i32, %c0_i32_0 : i32, i32
  }
  func.func @transform_12(%arg0: i32, %arg1: i32) -> (i32, i32) {
    %c0_i32 = arith.constant 0 : i32
    %c0_i32_0 = arith.constant 0 : i32
    %c0_i32_1 = arith.constant 0 : i32
    return %c0_i32, %c0_i32_0 : i32, i32
  }
  func.func @transform_13(%arg0: i32, %arg1: i32) -> (i32, i32) {
    %c0_i32 = arith.constant 0 : i32
    %c0_i32_0 = arith.constant 0 : i32
    %c0_i32_1 = arith.constant 0 : i32
    return %c0_i32, %c0_i32_0 : i32, i32
  }
  func.func @transform_14(%arg0: i32, %arg1: i32) -> (i32, i32) {
    %c0_i32 = arith.constant 0 : i32
    %c0_i32_0 = arith.constant 0 : i32
    return %arg1, %c0_i32 : i32, i32
  }
  func.func @transform_15(%arg0: i32, %arg1: i32) -> (i32, i32) {
    %c0_i32 = arith.constant 0 : i32
    %c0_i32_0 = arith.constant 0 : i32
    return %arg1, %c0_i32 : i32, i32
  }
  func.func @transform_16(%arg0: i32, %arg1: i32) -> (i32, i32) {
    %c0_i32 = arith.constant 0 : i32
    %c0_i32_0 = arith.constant 0 : i32
    return %arg1, %c0_i32 : i32, i32
  }
  func.func @transform_17(%arg0: i32, %arg1: i32) -> (i32, i32) {
    %c0_i32 = arith.constant 0 : i32
    %c0_i32_0 = arith.constant 0 : i32
    return %arg1, %c0_i32 : i32, i32
  }
  func.func @transform_18(%arg0: i32, %arg1: i32) -> (i32, i32) {
    %c0_i32 = arith.constant 0 : i32
    %c0_i32_0 = arith.constant 0 : i32
    %c0_i32_1 = arith.constant 0 : i32
    return %c0_i32, %c0_i32_0 : i32, i32
  }
}

</mosaic_0001>

<llo_original>
// kernel: tpu_custom_call.1
$region0: #{tpu_custom_call.1}
  #allocation0 [shape = 'u32[]', space=smem, size = 0x4, offset = 0x4, fixed_abs, tag = 'smem constant byte address 0x4 - core index']
  #allocation1 [shape = 'u32[72,128]{1,0:T(1,128)}', space=vmem, size = 0x9000, scoped, tag = 'internal scratch']
  #allocation2 [shape = 'bf16[22,128]{1,0:T(8,128)(2,1)}', space=vmem, size = 0x1800, scoped, tag = 'scratch operand']
  #allocation3 [shape = 'f32[1,12]{1,0:T(1,128)}', space=vmem, size = 0x200, scoped, tag = 'scratch operand']
  #allocation4 [shape = 'f32[1,12]{1,0:T(1,128)}', space=vmem, size = 0x200, scoped, tag = 'scratch operand']
  #allocation5 [shape = 'f32[2,32]{1,0:T(2,128)}', space=vmem, size = 0x400, scoped, tag = 'scratch operand']
  #allocation6 [shape = 'f32[1]{0:T(128)S(6)}', space=smem, size = 0x200, scoped, tag = 'scoped memory for tpu_custom_call.1']
  #allocation7 [shape = 'f32[1]{0:T(128)S(6)}', space=smem, size = 0x200, scoped, tag = 'scoped memory for tpu_custom_call.1']
  %s0 = inlined_call_operand.<no memory space> [shape: f32[1], index: 0, kind: input, shape index: {}]
  %s1 = inlined_call_operand.<no memory space> [shape: f32[1], index: 1, kind: input, shape index: {}]
  %s2 = inlined_call_operand.vmem [shape: f32[22,32], index: 2, kind: input, shape index: {}]
  %s3 = inlined_call_operand.vmem [shape: f32[32,128], index: 3, kind: input, shape index: {}]
  %s4 = inlined_call_operand.vmem [shape: f32[1,128], index: 4, kind: input, shape index: {}]
  %s5 = inlined_call_operand.vmem [shape: f32[8,64], index: 5, kind: input, shape index: {}]
  %s6 = inlined_call_operand.vmem [shape: f32[1,64], index: 6, kind: input, shape index: {}]
  %s7 = inlined_call_operand.vmem [shape: f32[1,32], index: 7, kind: input, shape index: {}]
  %s8 = inlined_call_operand.hbm [shape: f32[32,256], index: 8, kind: input, shape index: {}]
  %s9 = inlined_call_operand.vmem [shape: f32[1,256], index: 9, kind: input, shape index: {}]
  %s10 = inlined_call_operand.hbm [shape: f32[256,256], index: 10, kind: input, shape index: {}]
  %s11 = inlined_call_operand.vmem [shape: f32[1,256], index: 11, kind: input, shape index: {}]
  %s12 = inlined_call_operand.hbm [shape: f32[256,128], index: 12, kind: input, shape index: {}]
  %s13 = inlined_call_operand.vmem [shape: f32[1,128], index: 13, kind: input, shape index: {}]
  %s14 = inlined_call_operand.vmem [shape: f32[24,8], index: 14, kind: input, shape index: {}]
  %s15 = inlined_call_operand.vmem [shape: s32[24,1], index: 15, kind: input, shape index: {}]
  %s16 = inlined_call_operand.vmem [shape: s32[24,1], index: 16, kind: input, shape index: {}]
  %s17 = inlined_call_operand.vmem [shape: s32[24,1], index: 17, kind: input, shape index: {}]
  %s18 = inlined_call_operand.hbm [shape: f32[2,128], index: 18, kind: output, shape index: {}]
  %s19 = sld [smem:[#allocation0]]
  $region133: #{tpu_custom_call.1} parent=0
    _
  %s21 = ssub.s32 1, %s19
  %s22 = scalar_select 0, %s21, %s19
  %23 = sst [smem:[#allocation6]] %s0
  %24 = sst [smem:[#allocation7]] %s1
  $region1: #{tpu_custom_call.1} parent=0
    #allocation8 [shape = 'u8[32768]{0}', space=vmem, size = 0x8000, scoped, tag = 'input window, operand 8, single buffered']
    #allocation9 [shape = 's32[2]{0}', space=sflag, size = 0x8, scoped, tag = 'scoped memory for tpu_custom_call.1']
    #allocation10 [shape = 's32[2]{0}', space=sflag, size = 0x8, scoped, tag = 'scoped memory for tpu_custom_call.1']
    #allocation11 [shape = 'u8[262144]{0}', space=vmem, size = 0x40000, scoped, tag = 'input window, operand 10, single buffered']
    #allocation12 [shape = 's32[1]{0}', space=sflag, size = 0x4, scoped, tag = 'scoped memory for tpu_custom_call.1']
    #allocation13 [shape = 'u8[131072]{0}', space=vmem, size = 0x20000, scoped, tag = 'input window, operand 12, single buffered']
    #allocation14 [shape = 'u8[1024]{0}', space=vmem, size = 0x400, scoped, tag = 'output window, operand 0, single buffered']
    %25 = vsyncpa [#allocation9], 0
    %26 = vsyncpa [#allocation12], 0
    %27 = vsyncpa [#allocation10], 0
    loop: start=0, step=1, limit=8
    $region2: #{tpu_custom_call.1} parent=1 // loop_pre_header
      _
    $region3: #{tpu_custom_call.1} parent=1 // loop_header
      %s29 = sphi 0, %s33
      %p30 = scmp.ge.s32.totalorder %s29, 8
      %s36 = sphi 0, %s48
      %s37 = sphi 0, %s44
      %s38 = sphi 0, %s36
      %s39 = sphi 0, %s37
      %s40 = sphi 0, %s38
      %s41 = sphi 0, %s39
      %s49 = sphi 0, %s49
      %s51 = sphi 0, %s49
      %s52 = sphi 0, %s51
      %s66 = sphi 0, %s52
      %s70 = sphi 0, %s70
      %s72 = sphi 0, %s70
      %s73 = sphi 0, %s72
      %s87 = sphi 0, %s73
      %s91 = sphi 0, %s91
      %s93 = sphi 0, %s91
      %s94 = sphi 0, %s93
      %s108 = sphi 0, %s94
      %s112 = sphi 0, %s112
      %s114 = sphi 0, %s112
      %s115 = sphi 0, %s114
      %s129 = sphi 0, %s115
      %s133 = sphi 0, %s133
      %s135 = sphi 0, %s133
      %s136 = sphi 0, %s135
      %s150 = sphi 0, %s136
      %s154 = sphi 0, %s154
      %s156 = sphi 0, %s154
      %s157 = sphi 0, %s156
      %s171 = sphi 0, %s157
      %s175 = sphi 0, %s175
      %s177 = sphi 0, %s175
      %s178 = sphi 0, %s177
      %s192 = sphi 0, %s178
      %s196 = sphi 0, %s196
      %s198 = sphi 0, %s196
      %s199 = sphi 0, %s198
      %s213 = sphi 0, %s199
      %s217 = sphi 0, %s217
      %s219 = sphi 0, %s217
      %s220 = sphi 0, %s219
      %s234 = sphi 0, %s220
      %s238 = sphi 0, %s238
      %s240 = sphi 0, %s238
      %s241 = sphi 0, %s240
      %s255 = sphi 0, %s241
      %s259 = sphi 0, %s259
      %s261 = sphi 0, %s259
      %s262 = sphi 0, %s261
      %s276 = sphi 0, %s262
      %s280 = sphi 0, %s280
      %s282 = sphi 0, %s280
      %s283 = sphi 0, %s282
      %s297 = sphi 0, %s283
      %s301 = sphi 0, %s301
      %s303 = sphi 0, %s301
      %s304 = sphi 0, %s303
      %s318 = sphi 0, %s304
      %s322 = sphi 0, %s322
      %s324 = sphi 0, %s322
      %s325 = sphi 0, %s324
      %s339 = sphi 0, %s325
      %s345 = sphi 0, %s347
      %s348 = sphi 0, %s345
      %s349 = sphi 0, %s348
      %s365 = sphi 0, %s349
      %s371 = sphi 0, %s373
      %s374 = sphi 0, %s371
      %s375 = sphi 0, %s374
      %s391 = sphi 0, %s375
      %s397 = sphi 0, %s399
      %s400 = sphi 0, %s397
      %s401 = sphi 0, %s400
      %s417 = sphi 0, %s401
      %s423 = sphi 0, %s425
      %s426 = sphi 0, %s423
      %s427 = sphi 0, %s426
      %s443 = sphi 0, %s427
      %s447 = sphi 0, %s447
      %s449 = sphi 0, %s447
      %s450 = sphi 0, %s449
      %s464 = sphi 0, %s450
    $region4: #{tpu_custom_call.1} parent=1 // loop_header_branch
      %32 = sbr.rel (%p30) target = $region8
    $region5: #{tpu_custom_call.1} parent=1 // loop_body
      %s34 = ssub.s32 %s29, 1
      %s35 = ssub.s32 %s29, 2
      %s42 = sadd.s32 1, %s37
      %p43 = scmp.ge.s32.totalorder %s42, 3
      %s44 = scalar_select %p43, 0, %s42
      %s45 = sadd.s32 1, %s36
      %s46 = scalar_select %p43, %s45, %s36
      %p47 = scmp.ge.s32.totalorder %s46, 2
      %s48 = scalar_select %p47, 0, %s46
      %s50 = sadd.s32 %s49, 1
      %p53 = scmp.eq.s32.totalorder %s29, 5
      %p54 = scmp.ne.s32.totalorder %s49, %s51
      %p55 = scmp.eq.s32.totalorder %s29, 0
      %p56 = por %p54, %p55
      %p57 = scmp.ne.s32.totalorder %s49, %s51
      %p58 = scmp.eq.s32.totalorder %s34, 5
      %p59 = por %p57, %p58
      %p60 = scmp.ne.s32.totalorder %s51, %s52
      %p61 = scmp.eq.s32.totalorder %s34, 0
      %p62 = por %p60, %p61
      %p63 = scmp.ne.s32.totalorder %s51, %s52
      %p64 = scmp.eq.s32.totalorder %s35, 5
      %p65 = por %p63, %p64
      %p67 = scmp.ne.s32.totalorder %s52, %s66
      %p68 = scmp.eq.s32.totalorder %s35, 0
      %p69 = por %p67, %p68
      %s71 = sadd.s32 %s70, 1
      %p74 = scmp.eq.s32.totalorder %s29, 5
      %p75 = scmp.ne.s32.totalorder %s70, %s72
      %p76 = scmp.eq.s32.totalorder %s29, 0
      %p77 = por %p75, %p76
      %p78 = scmp.ne.s32.totalorder %s70, %s72
      %p79 = scmp.eq.s32.totalorder %s34, 5
      %p80 = por %p78, %p79
      %p81 = scmp.ne.s32.totalorder %s72, %s73
      %p82 = scmp.eq.s32.totalorder %s34, 0
      %p83 = por %p81, %p82
      %p84 = scmp.ne.s32.totalorder %s72, %s73
      %p85 = scmp.eq.s32.totalorder %s35, 5
      %p86 = por %p84, %p85
      %p88 = scmp.ne.s32.totalorder %s73, %s87
      %p89 = scmp.eq.s32.totalorder %s35, 0
      %p90 = por %p88, %p89
      %s92 = sadd.s32 %s91, 1
      %p95 = scmp.eq.s32.totalorder %s29, 5
      %p96 = scmp.ne.s32.totalorder %s91, %s93
      %p97 = scmp.eq.s32.totalorder %s29, 0
      %p98 = por %p96, %p97
      %p99 = scmp.ne.s32.totalorder %s91, %s93
      %p100 = scmp.eq.s32.totalorder %s34, 5
      %p101 = por %p99, %p100
      %p102 = scmp.ne.s32.totalorder %s93, %s94
      %p103 = scmp.eq.s32.totalorder %s34, 0
      %p104 = por %p102, %p103
      %p105 = scmp.ne.s32.totalorder %s93, %s94
      %p106 = scmp.eq.s32.totalorder %s35, 5
      %p107 = por %p105, %p106
      %p109 = scmp.ne.s32.totalorder %s94, %s108
      %p110 = scmp.eq.s32.totalorder %s35, 0
      %p111 = por %p109, %p110
      %s113 = sadd.s32 %s112, 1
      %p116 = scmp.eq.s32.totalorder %s29, 5
      %p117 = scmp.ne.s32.totalorder %s112, %s114
      %p118 = scmp.eq.s32.totalorder %s29, 0
      %p119 = por %p117, %p118
      %p120 = scmp.ne.s32.totalorder %s112, %s114
      %p121 = scmp.eq.s32.totalorder %s34, 5
      %p122 = por %p120, %p121
      %p123 = scmp.ne.s32.totalorder %s114, %s115
      %p124 = scmp.eq.s32.totalorder %s34, 0
      %p125 = por %p123, %p124
      %p126 = scmp.ne.s32.totalorder %s114, %s115
      %p127 = scmp.eq.s32.totalorder %s35, 5
      %p128 = por %p126, %p127
      %p130 = scmp.ne.s32.totalorder %s115, %s129
      %p131 = scmp.eq.s32.totalorder %s35, 0
      %p132 = por %p130, %p131
      %s134 = sadd.s32 %s133, 1
      %p137 = scmp.eq.s32.totalorder %s29, 5
      %p138 = scmp.ne.s32.totalorder %s133, %s135
      %p139 = scmp.eq.s32.totalorder %s29, 0
      %p140 = por %p138, %p139
      %p141 = scmp.ne.s32.totalorder %s133, %s135
      %p142 = scmp.eq.s32.totalorder %s34, 5
      %p143 = por %p141, %p142
      %p144 = scmp.ne.s32.totalorder %s135, %s136
      %p145 = scmp.eq.s32.totalorder %s34, 0
      %p146 = por %p144, %p145
      %p147 = scmp.ne.s32.totalorder %s135, %s136
      %p148 = scmp.eq.s32.totalorder %s35, 5
      %p149 = por %p147, %p148
      %p151 = scmp.ne.s32.totalorder %s136, %s150
      %p152 = scmp.eq.s32.totalorder %s35, 0
      %p153 = por %p151, %p152
      %s155 = sadd.s32 %s154, 1
      %p158 = scmp.eq.s32.totalorder %s29, 5
      %p159 = scmp.ne.s32.totalorder %s154, %s156
      %p160 = scmp.eq.s32.totalorder %s29, 0
      %p161 = por %p159, %p160
      %p162 = scmp.ne.s32.totalorder %s154, %s156
      %p163 = scmp.eq.s32.totalorder %s34, 5
      %p164 = por %p162, %p163
      %p165 = scmp.ne.s32.totalorder %s156, %s157
      %p166 = scmp.eq.s32.totalorder %s34, 0
      %p167 = por %p165, %p166
      %p168 = scmp.ne.s32.totalorder %s156, %s157
      %p169 = scmp.eq.s32.totalorder %s35, 5
      %p170 = por %p168, %p169
      %p172 = scmp.ne.s32.totalorder %s157, %s171
      %p173 = scmp.eq.s32.totalorder %s35, 0
      %p174 = por %p172, %p173
      %s176 = sadd.s32 %s175, 1
      %p179 = scmp.eq.s32.totalorder %s29, 5
      %p180 = scmp.ne.s32.totalorder %s175, %s177
      %p181 = scmp.eq.s32.totalorder %s29, 0
      %p182 = por %p180, %p181
      %p183 = scmp.ne.s32.totalorder %s175, %s177
      %p184 = scmp.eq.s32.totalorder %s34, 5
      %p185 = por %p183, %p184
      %p186 = scmp.ne.s32.totalorder %s177, %s178
      %p187 = scmp.eq.s32.totalorder %s34, 0
      %p188 = por %p186, %p187
      %p189 = scmp.ne.s32.totalorder %s177, %s178
      %p190 = scmp.eq.s32.totalorder %s35, 5
      %p191 = por %p189, %p190
      %p193 = scmp.ne.s32.totalorder %s178, %s192
      %p194 = scmp.eq.s32.totalorder %s35, 0
      %p195 = por %p193, %p194
      %s197 = sadd.s32 %s196, 1
      %p200 = scmp.eq.s32.totalorder %s29, 5
      %p201 = scmp.ne.s32.totalorder %s196, %s198
      %p202 = scmp.eq.s32.totalorder %s29, 0
      %p203 = por %p201, %p202
      %p204 = scmp.ne.s32.totalorder %s196, %s198
      %p205 = scmp.eq.s32.totalorder %s34, 5
      %p206 = por %p204, %p205
      %p207 = scmp.ne.s32.totalorder %s198, %s199
      %p208 = scmp.eq.s32.totalorder %s34, 0
      %p209 = por %p207, %p208
      %p210 = scmp.ne.s32.totalorder %s198, %s199
      %p211 = scmp.eq.s32.totalorder %s35, 5
      %p212 = por %p210, %p211
      %p214 = scmp.ne.s32.totalorder %s199, %s213
      %p215 = scmp.eq.s32.totalorder %s35, 0
      %p216 = por %p214, %p215
      %s218 = sadd.s32 %s217, 1
      %p221 = scmp.eq.s32.totalorder %s29, 5
      %p222 = scmp.ne.s32.totalorder %s217, %s219
      %p223 = scmp.eq.s32.totalorder %s29, 0
      %p224 = por %p222, %p223
      %p225 = scmp.ne.s32.totalorder %s217, %s219
      %p226 = scmp.eq.s32.totalorder %s34, 5
      %p227 = por %p225, %p226
      %p228 = scmp.ne.s32.totalorder %s219, %s220
      %p229 = scmp.eq.s32.totalorder %s34, 0
      %p230 = por %p228, %p229
      %p231 = scmp.ne.s32.totalorder %s219, %s220
      %p232 = scmp.eq.s32.totalorder %s35, 5
      %p233 = por %p231, %p232
      %p235 = scmp.ne.s32.totalorder %s220, %s234
      %p236 = scmp.eq.s32.totalorder %s35, 0
      %p237 = por %p235, %p236
      %s239 = sadd.s32 %s238, 1
      %p242 = scmp.eq.s32.totalorder %s29, 5
      %p243 = scmp.ne.s32.totalorder %s238, %s240
      %p244 = scmp.eq.s32.totalorder %s29, 0
      %p245 = por %p243, %p244
      %p246 = scmp.ne.s32.totalorder %s238, %s240
      %p247 = scmp.eq.s32.totalorder %s34, 5
      %p248 = por %p246, %p247
      %p249 = scmp.ne.s32.totalorder %s240, %s241
      %p250 = scmp.eq.s32.totalorder %s34, 0
      %p251 = por %p249, %p250
      %p252 = scmp.ne.s32.totalorder %s240, %s241
      %p253 = scmp.eq.s32.totalorder %s35, 5
      %p254 = por %p252, %p253
      %p256 = scmp.ne.s32.totalorder %s241, %s255
      %p257 = scmp.eq.s32.totalorder %s35, 0
      %p258 = por %p256, %p257
      %s260 = sadd.s32 %s259, 1
      %p263 = scmp.eq.s32.totalorder %s29, 5
      %p264 = scmp.ne.s32.totalorder %s259, %s261
      %p265 = scmp.eq.s32.totalorder %s29, 0
      %p266 = por %p264, %p265
      %p267 = scmp.ne.s32.totalorder %s259, %s261
      %p268 = scmp.eq.s32.totalorder %s34, 5
      %p269 = por %p267, %p268
      %p270 = scmp.ne.s32.totalorder %s261, %s262
      %p271 = scmp.eq.s32.totalorder %s34, 0
      %p272 = por %p270, %p271
      %p273 = scmp.ne.s32.totalorder %s261, %s262
      %p274 = scmp.eq.s32.totalorder %s35, 5
      %p275 = por %p273, %p274
      %p277 = scmp.ne.s32.totalorder %s262, %s276
      %p278 = scmp.eq.s32.totalorder %s35, 0
      %p279 = por %p277, %p278
      %s281 = sadd.s32 %s280, 1
      %p284 = scmp.eq.s32.totalorder %s29, 5
      %p285 = scmp.ne.s32.totalorder %s280, %s282
      %p286 = scmp.eq.s32.totalorder %s29, 0
      %p287 = por %p285, %p286
      %p288 = scmp.ne.s32.totalorder %s280, %s282
      %p289 = scmp.eq.s32.totalorder %s34, 5
      %p290 = por %p288, %p289
      %p291 = scmp.ne.s32.totalorder %s282, %s283
      %p292 = scmp.eq.s32.totalorder %s34, 0
      %p293 = por %p291, %p292
      %p294 = scmp.ne.s32.totalorder %s282, %s283
      %p295 = scmp.eq.s32.totalorder %s35, 5
      %p296 = por %p294, %p295
      %p298 = scmp.ne.s32.totalorder %s283, %s297
      %p299 = scmp.eq.s32.totalorder %s35, 0
      %p300 = por %p298, %p299
      %s302 = sadd.s32 %s301, 1
      %p305 = scmp.eq.s32.totalorder %s29, 5
      %p306 = scmp.ne.s32.totalorder %s301, %s303
      %p307 = scmp.eq.s32.totalorder %s29, 0
      %p308 = por %p306, %p307
      %p309 = scmp.ne.s32.totalorder %s301, %s303
      %p310 = scmp.eq.s32.totalorder %s34, 5
      %p311 = por %p309, %p310
      %p312 = scmp.ne.s32.totalorder %s303, %s304
      %p313 = scmp.eq.s32.totalorder %s34, 0
      %p314 = por %p312, %p313
      %p315 = scmp.ne.s32.totalorder %s303, %s304
      %p316 = scmp.eq.s32.totalorder %s35, 5
      %p317 = por %p315, %p316
      %p319 = scmp.ne.s32.totalorder %s304, %s318
      %p320 = scmp.eq.s32.totalorder %s35, 0
      %p321 = por %p319, %p320
      %s323 = sadd.s32 %s322, 1
      %p326 = scmp.eq.s32.totalorder %s29, 5
      %p327 = scmp.ne.s32.totalorder %s322, %s324
      %p328 = scmp.eq.s32.totalorder %s29, 0
      %p329 = por %p327, %p328
      %p330 = scmp.ne.s32.totalorder %s322, %s324
      %p331 = scmp.eq.s32.totalorder %s34, 5
      %p332 = por %p330, %p331
      %p333 = scmp.ne.s32.totalorder %s324, %s325
      %p334 = scmp.eq.s32.totalorder %s34, 0
      %p335 = por %p333, %p334
      %p336 = scmp.ne.s32.totalorder %s324, %s325
      %p337 = scmp.eq.s32.totalorder %s35, 5
      %p338 = por %p336, %p337
      %p340 = scmp.ne.s32.totalorder %s325, %s339
      %p341 = scmp.eq.s32.totalorder %s35, 0
      %p342 = por %p340, %p341
      %s343 = ssub.s32 %s37, %s44
      %p344 = scmp.eq.s32.totalorder %s343, 0
      %s346 = sadd.s32 %s345, 1
      %s347 = scalar_select %p344, %s345, %s346
      %p350 = pneg %p344
      %p351 = scmp.eq.s32.totalorder %s29, 5
      %p352 = por %p350, %p351
      %p353 = scmp.ne.s32.totalorder %s345, %s348
      %p354 = scmp.eq.s32.totalorder %s29, 0
      %p355 = por %p353, %p354
      %p356 = scmp.ne.s32.totalorder %s345, %s348
      %p357 = scmp.eq.s32.totalorder %s34, 5
      %p358 = por %p356, %p357
      %p359 = scmp.ne.s32.totalorder %s348, %s349
      %p360 = scmp.eq.s32.totalorder %s34, 0
      %p361 = por %p359, %p360
      %p362 = scmp.ne.s32.totalorder %s348, %s349
      %p363 = scmp.eq.s32.totalorder %s35, 5
      %p364 = por %p362, %p363
      %p366 = scmp.ne.s32.totalorder %s349, %s365
      %p367 = scmp.eq.s32.totalorder %s35, 0
      %p368 = por %p366, %p367
      %s369 = ssub.s32 %s37, %s44
      %p370 = scmp.eq.s32.totalorder %s369, 0
      %s372 = sadd.s32 %s371, 1
      %s373 = scalar_select %p370, %s371, %s372
      %p376 = pneg %p370
      %p377 = scmp.eq.s32.totalorder %s29, 5
      %p378 = por %p376, %p377
      %p379 = scmp.ne.s32.totalorder %s371, %s374
      %p380 = scmp.eq.s32.totalorder %s29, 0
      %p381 = por %p379, %p380
      %p382 = scmp.ne.s32.totalorder %s371, %s374
      %p383 = scmp.eq.s32.totalorder %s34, 5
      %p384 = por %p382, %p383
      %p385 = scmp.ne.s32.totalorder %s374, %s375
      %p386 = scmp.eq.s32.totalorder %s34, 0
      %p387 = por %p385, %p386
      %p388 = scmp.ne.s32.totalorder %s374, %s375
      %p389 = scmp.eq.s32.totalorder %s35, 5
      %p390 = por %p388, %p389
      %p392 = scmp.ne.s32.totalorder %s375, %s391
      %p393 = scmp.eq.s32.totalorder %s35, 0
      %p394 = por %p392, %p393
      %s395 = ssub.s32 %s37, %s44
      %p396 = scmp.eq.s32.totalorder %s395, 0
      %s398 = sadd.s32 %s397, 1
      %s399 = scalar_select %p396, %s397, %s398
      %p402 = pneg %p396
      %p403 = scmp.eq.s32.totalorder %s29, 5
      %p404 = por %p402, %p403
      %p405 = scmp.ne.s32.totalorder %s397, %s400
      %p406 = scmp.eq.s32.totalorder %s29, 0
      %p407 = por %p405, %p406
      %p408 = scmp.ne.s32.totalorder %s397, %s400
      %p409 = scmp.eq.s32.totalorder %s34, 5
      %p410 = por %p408, %p409
      %p411 = scmp.ne.s32.totalorder %s400, %s401
      %p412 = scmp.eq.s32.totalorder %s34, 0
      %p413 = por %p411, %p412
      %p414 = scmp.ne.s32.totalorder %s400, %s401
      %p415 = scmp.eq.s32.totalorder %s35, 5
      %p416 = por %p414, %p415
      %p418 = scmp.ne.s32.totalorder %s401, %s417
      %p419 = scmp.eq.s32.totalorder %s35, 0
      %p420 = por %p418, %p419
      %s421 = ssub.s32 %s37, %s44
      %p422 = scmp.eq.s32.totalorder %s421, 0
      %s424 = sadd.s32 %s423, 1
      %s425 = scalar_select %p422, %s423, %s424
      %p428 = pneg %p422
      %p429 = scmp.eq.s32.totalorder %s29, 5
      %p430 = por %p428, %p429
      %p431 = scmp.ne.s32.totalorder %s423, %s426
      %p432 = scmp.eq.s32.totalorder %s29, 0
      %p433 = por %p431, %p432
      %p434 = scmp.ne.s32.totalorder %s423, %s426
      %p435 = scmp.eq.s32.totalorder %s34, 5
      %p436 = por %p434, %p435
      %p437 = scmp.ne.s32.totalorder %s426, %s427
      %p438 = scmp.eq.s32.totalorder %s34, 0
      %p439 = por %p437, %p438
      %p440 = scmp.ne.s32.totalorder %s426, %s427
      %p441 = scmp.eq.s32.totalorder %s35, 5
      %p442 = por %p440, %p441
      %p444 = scmp.ne.s32.totalorder %s427, %s443
      %p445 = scmp.eq.s32.totalorder %s35, 0
      %p446 = por %p444, %p445
      %s448 = sadd.s32 %s447, 1
      %p451 = scmp.eq.s32.totalorder %s29, 5
      %p452 = scmp.ne.s32.totalorder %s447, %s449
      %p453 = scmp.eq.s32.totalorder %s29, 0
      %p454 = por %p452, %p453
      %p455 = scmp.ne.s32.totalorder %s447, %s449
      %p456 = scmp.eq.s32.totalorder %s34, 5
      %p457 = por %p455, %p456
      %p458 = scmp.ne.s32.totalorder %s449, %s450
      %p459 = scmp.eq.s32.totalorder %s34, 0
      %p460 = por %p458, %p459
      %p461 = scmp.ne.s32.totalorder %s449, %s450
      %p462 = scmp.eq.s32.totalorder %s35, 5
      %p463 = por %p461, %p462
      %p465 = scmp.ne.s32.totalorder %s450, %s464
      %p466 = scmp.eq.s32.totalorder %s35, 0
      %p467 = por %p465, %p466
      %p468 = scmp.le.s32.totalorder 1, %s29
      %p469 = scmp.lt.s32.totalorder %s29, 7
      %p470 = pnand %p468, %p469
      %p471 = pneg %p470
      // Predicated region
      $region9: #{tpu_custom_call.1} parent=5 // pred_check
        _
      $region10: #{tpu_custom_call.1} parent=5 // pred_check_branch
        %473 = sbr.rel (%p470) target = $region12
      $region11: #{tpu_custom_call.1} parent=5 // pred_region
        %s474 = ssub.s32 %s29, 1
        // Predicated region
        $region13: #{tpu_custom_call.1} parent=11 // pred_check
          %p475 = pneg %p62
        $region14: #{tpu_custom_call.1} parent=11 // pred_check_branch
          %477 = sbr.rel (%p475) target = $region16
        $region15: #{tpu_custom_call.1} parent=11 // pred_region
          _
        $region16: #{tpu_custom_call.1} parent=11 // pred_fallthru
          _
        // Predicated region
        $region17: #{tpu_custom_call.1} parent=11 // pred_check
          %p478 = pneg %p83
        $region18: #{tpu_custom_call.1} parent=11 // pred_check_branch
          %480 = sbr.rel (%p478) target = $region20
        $region19: #{tpu_custom_call.1} parent=11 // pred_region
          _
        $region20: #{tpu_custom_call.1} parent=11 // pred_fallthru
          _
        // Predicated region
        $region21: #{tpu_custom_call.1} parent=11 // pred_check
          %p481 = pneg %p104
        $region22: #{tpu_custom_call.1} parent=11 // pred_check_branch
          %483 = sbr.rel (%p481) target = $region24
        $region23: #{tpu_custom_call.1} parent=11 // pred_region
          _
        $region24: #{tpu_custom_call.1} parent=11 // pred_fallthru
          _
        // Predicated region
        $region25: #{tpu_custom_call.1} parent=11 // pred_check
          %p484 = pneg %p125
        $region26: #{tpu_custom_call.1} parent=11 // pred_check_branch
          %486 = sbr.rel (%p484) target = $region28
        $region27: #{tpu_custom_call.1} parent=11 // pred_region
          _
        $region28: #{tpu_custom_call.1} parent=11 // pred_fallthru
          _
        // Predicated region
        $region29: #{tpu_custom_call.1} parent=11 // pred_check
          %p487 = pneg %p146
        $region30: #{tpu_custom_call.1} parent=11 // pred_check_branch
          %489 = sbr.rel (%p487) target = $region32
        $region31: #{tpu_custom_call.1} parent=11 // pred_region
          _
        $region32: #{tpu_custom_call.1} parent=11 // pred_fallthru
          _
        // Predicated region
        $region33: #{tpu_custom_call.1} parent=11 // pred_check
          %p490 = pneg %p167
        $region34: #{tpu_custom_call.1} parent=11 // pred_check_branch
          %492 = sbr.rel (%p490) target = $region36
        $region35: #{tpu_custom_call.1} parent=11 // pred_region
          _
        $region36: #{tpu_custom_call.1} parent=11 // pred_fallthru
          _
        // Predicated region
        $region37: #{tpu_custom_call.1} parent=11 // pred_check
          %p493 = pneg %p188
        $region38: #{tpu_custom_call.1} parent=11 // pred_check_branch
          %495 = sbr.rel (%p493) target = $region40
        $region39: #{tpu_custom_call.1} parent=11 // pred_region
          _
        $region40: #{tpu_custom_call.1} parent=11 // pred_fallthru
          _
        // Predicated region
        $region41: #{tpu_custom_call.1} parent=11 // pred_check
          %p496 = pneg %p209
        $region42: #{tpu_custom_call.1} parent=11 // pred_check_branch
          %498 = sbr.rel (%p496) target = $region44
        $region43: #{tpu_custom_call.1} parent=11 // pred_region
          _
        $region44: #{tpu_custom_call.1} parent=11 // pred_fallthru
          _
        // Predicated region
        $region45: #{tpu_custom_call.1} parent=11 // pred_check
          %p499 = pneg %p230
        $region46: #{tpu_custom_call.1} parent=11 // pred_check_branch
          %501 = sbr.rel (%p499) target = $region48
        $region47: #{tpu_custom_call.1} parent=11 // pred_region
          %503 = vsyncadd [#allocation9], 0
          %s504 = sshll.u32 %s8, 4
          %s505 = int_to_ptr.hbm [resolvable:$true] %s504
          %s506 = sshll.u32 [#allocation8], 4
          %s507 = int_to_ptr.vmem [resolvable:$true] %s506
          %512 = dma.hbm_to_vmem [thread:$0]  %s505, 1024, %s507, [#allocation9], 256, 256, 16
        $region48: #{tpu_custom_call.1} parent=11 // pred_fallthru
          _
        // Predicated region
        $region49: #{tpu_custom_call.1} parent=11 // pred_check
          %p513 = pneg %p251
        $region50: #{tpu_custom_call.1} parent=11 // pred_check_branch
          %515 = sbr.rel (%p513) target = $region52
        $region51: #{tpu_custom_call.1} parent=11 // pred_region
          _
        $region52: #{tpu_custom_call.1} parent=11 // pred_fallthru
          _
        // Predicated region
        $region53: #{tpu_custom_call.1} parent=11 // pred_check
          %p516 = pneg %p272
        $region54: #{tpu_custom_call.1} parent=11 // pred_check_branch
          %518 = sbr.rel (%p516) target = $region56
        $region55: #{tpu_custom_call.1} parent=11 // pred_region
          %520 = vsyncadd [#allocation12], 0
          %s521 = sshll.u32 %s10, 4
          %s522 = int_to_ptr.hbm [resolvable:$true] %s521
          %s523 = sshll.u32 [#allocation11], 4
          %s524 = int_to_ptr.vmem [resolvable:$true] %s523
          %529 = dma.hbm_to_vmem [thread:$0]  %s522, 8192, %s524, [#allocation12], 256, 256, 16
        $region56: #{tpu_custom_call.1} parent=11 // pred_fallthru
          _
        // Predicated region
        $region57: #{tpu_custom_call.1} parent=11 // pred_check
          %p530 = pneg %p293
        $region58: #{tpu_custom_call.1} parent=11 // pred_check_branch
          %532 = sbr.rel (%p530) target = $region60
        $region59: #{tpu_custom_call.1} parent=11 // pred_region
          _
        $region60: #{tpu_custom_call.1} parent=11 // pred_fallthru
          _
        // Predicated region
        $region61: #{tpu_custom_call.1} parent=11 // pred_check
          %p533 = pneg %p314
        $region62: #{tpu_custom_call.1} parent=11 // pred_check_branch
          %535 = sbr.rel (%p533) target = $region64
        $region63: #{tpu_custom_call.1} parent=11 // pred_region
          %537 = vsyncadd [#allocation12], 0
          %s538 = sshll.u32 %s12, 4
          %s539 = int_to_ptr.hbm [resolvable:$true] %s538
          %s540 = sshll.u32 [#allocation13], 4
          %s541 = int_to_ptr.vmem [resolvable:$true] %s540
          %546 = dma.hbm_to_vmem [thread:$0]  %s539, 4096, %s541, [#allocation12], 128, 128, 8
        $region64: #{tpu_custom_call.1} parent=11 // pred_fallthru
          _
        // Predicated region
        $region65: #{tpu_custom_call.1} parent=11 // pred_check
          %p547 = pneg %p335
        $region66: #{tpu_custom_call.1} parent=11 // pred_check_branch
          %549 = sbr.rel (%p547) target = $region68
        $region67: #{tpu_custom_call.1} parent=11 // pred_region
          _
        $region68: #{tpu_custom_call.1} parent=11 // pred_fallthru
          _
      $region12: #{tpu_custom_call.1} parent=5 // pred_fallthru
        _
      %p550 = scmp.lt.s32.totalorder %s29, 6
      // Predicated region
      $region69: #{tpu_custom_call.1} parent=5 // pred_check
        %p551 = pneg %p550
      $region70: #{tpu_custom_call.1} parent=5 // pred_check_branch
        %553 = sbr.rel (%p551) target = $region72
      $region71: #{tpu_custom_call.1} parent=5 // pred_region
        // Predicated region
        $region73: #{tpu_custom_call.1} parent=71 // pred_check
          %p554 = pneg %p355
        $region74: #{tpu_custom_call.1} parent=71 // pred_check_branch
          %556 = sbr.rel (%p554) target = $region76
        $region75: #{tpu_custom_call.1} parent=71 // pred_region
          %p557 = scmp.lt.s32.totalorder %s37, 2
          %s558 = scalar_select %p557, %s37, 2
          %s559 = smul.addr %s558, 8
          %s560 = scalar_lea.vmem %s14, %s559
        $region76: #{tpu_custom_call.1} parent=71 // pred_fallthru
          _
        // Predicated region
        $region77: #{tpu_custom_call.1} parent=71 // pred_check
          %p561 = pneg %p381
        $region78: #{tpu_custom_call.1} parent=71 // pred_check_branch
          %563 = sbr.rel (%p561) target = $region80
        $region79: #{tpu_custom_call.1} parent=71 // pred_region
          %p564 = scmp.lt.s32.totalorder %s37, 2
          %s565 = scalar_select %p564, %s37, 2
          %s566 = smul.addr %s565, 8
          %s567 = scalar_lea.vmem %s15, %s566
        $region80: #{tpu_custom_call.1} parent=71 // pred_fallthru
          _
        // Predicated region
        $region81: #{tpu_custom_call.1} parent=71 // pred_check
          %p568 = pneg %p407
        $region82: #{tpu_custom_call.1} parent=71 // pred_check_branch
          %570 = sbr.rel (%p568) target = $region84
        $region83: #{tpu_custom_call.1} parent=71 // pred_region
          %p571 = scmp.lt.s32.totalorder %s37, 2
          %s572 = scalar_select %p571, %s37, 2
          %s573 = smul.addr %s572, 8
          %s574 = scalar_lea.vmem %s16, %s573
        $region84: #{tpu_custom_call.1} parent=71 // pred_fallthru
          _
        // Predicated region
        $region85: #{tpu_custom_call.1} parent=71 // pred_check
          %p575 = pneg %p433
        $region86: #{tpu_custom_call.1} parent=71 // pred_check_branch
          %577 = sbr.rel (%p575) target = $region88
        $region87: #{tpu_custom_call.1} parent=71 // pred_region
          %p578 = scmp.lt.s32.totalorder %s37, 2
          %s579 = scalar_select %p578, %s37, 2
          %s580 = smul.addr %s579, 8
          %s581 = scalar_lea.vmem %s17, %s580
        $region88: #{tpu_custom_call.1} parent=71 // pred_fallthru
          _
      $region72: #{tpu_custom_call.1} parent=5 // pred_fallthru
        _
      %p582 = scmp.le.s32.totalorder 1, %s29
      %p583 = scmp.lt.s32.totalorder %s29, 7
      %p584 = pnand %p582, %p583
      %p585 = pneg %p584
      // Predicated region
      $region89: #{tpu_custom_call.1} parent=5 // pred_check
        _
      $region90: #{tpu_custom_call.1} parent=5 // pred_check_branch
        %587 = sbr.rel (%p584) target = $region92
      $region91: #{tpu_custom_call.1} parent=5 // pred_region
        %s588 = ssub.s32 %s29, 1
        // Predicated region
        $region93: #{tpu_custom_call.1} parent=91 // pred_check
          %p589 = pneg %p230
        $region94: #{tpu_custom_call.1} parent=91 // pred_check_branch
          %591 = sbr.rel (%p589) target = $region96
        $region95: #{tpu_custom_call.1} parent=91 // pred_region
          %593 = dma.done [#allocation9], 1024
        $region96: #{tpu_custom_call.1} parent=91 // pred_fallthru
          _
        // Predicated region
        $region97: #{tpu_custom_call.1} parent=91 // pred_check
          %p594 = pneg %p272
        $region98: #{tpu_custom_call.1} parent=91 // pred_check_branch
          %596 = sbr.rel (%p594) target = $region100
        $region99: #{tpu_custom_call.1} parent=91 // pred_region
          %598 = dma.done [#allocation12], 8192
        $region100: #{tpu_custom_call.1} parent=91 // pred_fallthru
          _
        // Predicated region
        $region101: #{tpu_custom_call.1} parent=91 // pred_check
          %p599 = pneg %p314
        $region102: #{tpu_custom_call.1} parent=91 // pred_check_branch
          %601 = sbr.rel (%p599) target = $region104
        $region103: #{tpu_custom_call.1} parent=91 // pred_region
          %603 = dma.done [#allocation12], 4096
        $region104: #{tpu_custom_call.1} parent=91 // pred_fallthru
          _
        %p604 = pneg %p62
        %p605 = pneg %p59
        %p606 = pneg %p83
        %p607 = pneg %p80
        %p608 = pneg %p104
        %p609 = pneg %p101
        %p610 = pneg %p125
        %p611 = pneg %p122
        %p612 = pneg %p146
        %p613 = pneg %p143
        %p614 = pneg %p167
        %p615 = pneg %p164
        %p616 = pneg %p188
        %p617 = pneg %p185
        %p618 = pneg %p209
        %p619 = pneg %p206
        %p620 = pneg %p230
        %p621 = pneg %p227
        %p622 = pneg %p251
        %p623 = pneg %p248
        %p624 = pneg %p272
        %p625 = pneg %p269
        %p626 = pneg %p293
        %p627 = pneg %p290
        %p628 = pneg %p314
        %p629 = pneg %p311
        %p630 = pneg %p335
        %p631 = pneg %p332
        %p632 = scmp.lt.s32.totalorder %s39, 2
        %s633 = scalar_select %p632, %s39, 2
        %s634 = smul.addr %s633, 8
        %s635 = scalar_lea.vmem %s14, %s634
        %p636 = pneg %p361
        %p637 = pneg %p358
        %p638 = scmp.lt.s32.totalorder %s39, 2
        %s639 = scalar_select %p638, %s39, 2
        %s640 = smul.addr %s639, 8
        %s641 = scalar_lea.vmem %s15, %s640
        %p642 = pneg %p387
        %p643 = pneg %p384
        %p644 = scmp.lt.s32.totalorder %s39, 2
        %s645 = scalar_select %p644, %s39, 2
        %s646 = smul.addr %s645, 8
        %s647 = scalar_lea.vmem %s16, %s646
        %p648 = pneg %p413
        %p649 = pneg %p410
        %p650 = scmp.lt.s32.totalorder %s39, 2
        %s651 = scalar_select %p650, %s39, 2
        %s652 = smul.addr %s651, 8
        %s653 = scalar_lea.vmem %s17, %s652
        %p654 = pneg %p439
        %p655 = pneg %p436
        %p656 = pneg %p460
        %p657 = pneg %p457
        %p658 = scmp.lt.s32.totalorder %s39, 2
        %s659 = scalar_select %p658, %s39, 2
        %s660 = smul.addr %s659, 8
        %s661 = scalar_lea.vmem %s14, %s660
        %p662 = scmp.lt.s32.totalorder %s39, 2
        %s663 = scalar_select %p662, %s39, 2
        %s664 = smul.addr %s663, 8
        %s665 = scalar_lea.vmem %s15, %s664
        %p666 = scmp.lt.s32.totalorder %s39, 2
        %s667 = scalar_select %p666, %s39, 2
        %s668 = smul.addr %s667, 8
        %s669 = scalar_lea.vmem %s16, %s668
        %p670 = scmp.lt.s32.totalorder %s39, 2
        %s671 = scalar_select %p670, %s39, 2
        %s672 = smul.addr %s671, 8
        %s673 = scalar_lea.vmem %s17, %s672
        %p675 = scmp.eq.s32.totalorder %s38, 0
        %p676 = scmp.eq.s32.totalorder %s39, 0
        %p677 = pnand %p675, %p676
        %p678 = pneg %p677
        // Predicated region
        $region105: #{tpu_custom_call.1} parent=91 // pred_check
          _
        $region106: #{tpu_custom_call.1} parent=91 // pred_check_branch
          %680 = sbr.rel (%p677) target = $region108
        $region107: #{tpu_custom_call.1} parent=91 // pred_region
          %v681 = vld [vmem:[%s2] sm:$0xff]
          %v682 = vld [vmem:[%s2 + $0x8] sm:$0xff]
          %v683 = vld [vmem:[%s2 + $0x10] sm:$0x3f]
          %v684 = vld [vmem:[%s3] sm:$0xff]
          %v685 = vld [vmem:[%s3 + $0x8] sm:$0xff]
          %v686 = vld [vmem:[%s3 + $0x10] sm:$0xff]
          %v687 = vld [vmem:[%s3 + $0x18] sm:$0xff]
          %vm688 = vcmask 261120
          %v690 = vsel %vm688, %v681, 0
          %v693 = vsel %vm688, %v682, 0
          %v696 = vsel %vm688, %v683, 0
          %698 = vmatpush.msra.mxu0 0.0
          %699 = vmatpush.msra.mxu0 0.0
          %700 = vmatpush.msra.mxu0 0.0
          %701 = vmatpush.msra.mxu0 0.0
          %702 = vmatpush.msra.mxu0 0.0
          %703 = vmatpush.msra.mxu0 0.0
          %704 = vmatpush.msra.mxu0 0.0
          %705 = vmatpush.msra.mxu0 0.0
          %706 = vmatpush.msra.mxu0 0.0
          %707 = vmatpush.msra.mxu0 0.0
          %708 = vmatpush.msra.mxu0 0.0
          %709 = vmatpush.msra.mxu0 0.0
          %710 = vmatpush.msra.mxu0 %v687
          %711 = vmatpush.msra.mxu0 %v686
          %712 = vmatpush.msra.mxu0 %v685
          %713 = vmatpush.msra.mxu0 %v684
          %714 = vmatmul.f32.gmra.mxu0 %v690
          %v715 = vpop.f32.mrf.mxu0
          %v716 = vadd.f32 0.0, %v715
          %717 = vmatmul.f32.gmra.mxu0 %v693
          %v718 = vpop.f32.mrf.mxu0
          %v719 = vadd.f32 0.0, %v718
          %720 = vmatmul.f32.gmra.mxu0 %v696
          %v721 = vpop.f32.mrf.mxu0
          %v722 = vadd.f32 0.0, %v721
          %723 = vdwg.mxu0
          %v724 = vpack.c.bf16 %v716, %v716
          %v725 = vpack.c.bf16 %v719, %v719
          %v726 = vpack.c.bf16 %v722, %v722
          %727 = vst [vmem:[#allocation2] sm:$0xf] %v724
          %728 = vst [vmem:[#allocation2 + $0x4] sm:$0xf] %v725
          %729 = vst [vmem:[#allocation2 + $0x8] sm:$0x7] %v726
          %vm730 = vcmask 90112
          %731 = vst.msk [vmem:[#allocation3] sm:$0x1] %vm730, -1e+30
          %732 = vst.msk [vmem:[#allocation4] sm:$0x1] %vm730, 0.0
          %vm733 = vcmask 254976
          %734 = vst.msk [vmem:[#allocation5] sm:$0x3] %vm733, 0.0
        $region108: #{tpu_custom_call.1} parent=91 // pred_fallthru
          _
        %v735 = vld [vmem:[%s665] sm:$0xff]
        %v736 = vld [vmem:[%s669] sm:$0xff]
        %v737 = vlaneseq
        %v738 = vshrl.u32 %v737, 7
        %s739 = smul.u32 %s39, 8
        %v740 = vstv %s739
        %v741 = vadd.s32 %v740, %v738
        %vm742 = vcmp.lt.s32.totalorder %v741, 24
        %v743 = vlaneseq
        %v744 = vand.u32 %v743, 127
        %745 = vset.pattern.permute.xlu0 0
        %746 = vperm.xlu0 %745, %v735
        %v747 = vpop.permute.xlu0 %746
        %vm748 = vcmp.eq.s32.totalorder %v744, %v747
        %v749 = vadd.s32 %v736, 10
        %750 = vset.pattern.permute.xlu0 0
        %751 = vperm.xlu0 %750, %v749
        %v752 = vpop.permute.xlu0 %751
        %vm753 = vcmp.eq.s32.totalorder %v744, %v752
        %vm754 = vmor %vm748, %vm753
        %v755 = vsel %vm754, 1, 0
        %v756 = vcvt.s32.f32 %v755
        %v757 = vpack.c.bf16 %v756, %v756
        %758 = vset.pattern.permute.xlu0 0
        %759 = vperm.xlu0 %758, %v736
        %v760 = vpop.permute.xlu0 %759
        %vm761 = vcmp.eq.s32.totalorder %v744, %v760
        %v762 = vsel %vm761, 1, 0
        %v763 = vcvt.s32.f32 %v762
        %v764 = vld [vmem:[#allocation2] sm:$0xf]
        %v765 = vld [vmem:[#allocation2 + $0x4] sm:$0xf]
        %v766 = vld [vmem:[#allocation2 + $0x8] sm:$0x7]
        %v767 = vld [vmem:[%s4] sm:$0x1]
        %v768 = vld [vmem:[%s661] sm:$0xff]
        %v769 = vld [vmem:[%s5] sm:$0xff]
        %v770 = vld [vmem:[%s6] sm:$0x1]
        %v772 = vperm.slane %v770, 0
        %vm774 = vcmask 64512
        %v776 = vsel %vm774, %v768, 0
        %778 = vmatpush.msra.mxu0 0.0
        %779 = vmatpush.msra.mxu0 0.0
        %780 = vmatpush.msra.mxu0 0.0
        %781 = vmatpush.msra.mxu0 0.0
        %782 = vmatpush.msra.mxu0 0.0
        %783 = vmatpush.msra.mxu0 0.0
        %784 = vmatpush.msra.mxu0 0.0
        %785 = vmatpush.msra.mxu0 0.0
        %786 = vmatpush.msra.mxu0 0.0
        %787 = vmatpush.msra.mxu0 0.0
        %788 = vmatpush.msra.mxu0 0.0
        %789 = vmatpush.msra.mxu0 0.0
        %790 = vmatpush.msra.mxu0 0.0
        %791 = vmatpush.msra.mxu0 0.0
        %792 = vmatpush.msra.mxu0 0.0
        %793 = vmatpush.msra.mxu0 %v769
        %794 = vmatmul.f32.gmra.mxu0 %v776
        %v795 = vpop.f32.mrf.mxu0
        %v796 = vadd.f32 %v772, %v795
        %797 = vdwg.mxu0
        %v799 = vperm.slane %v767, 0
        %v804 = vunpack.c.l.b16 %v764
        %v805 = vunpack.c.l.b16 %v765
        %v806 = vunpack.c.l.b16 %v766
        %v807 = vpack.c.b16 %v805, %v804
        %v808 = vpack.c.b16 %v806, %v806
        %vm810 = vcmask 179200
        %v812 = vsel %vm810, %v757, 0
        %vm814 = vcmask 1042432
        %v816 = vsel %vm814, %v808, 0
        %818 = vmatpush.bf16.msra.mxu0 0
        %819 = vmatpush.bf16.msra.mxu0 0
        %820 = vmatpush.bf16.msra.mxu0 0
        %821 = vmatpush.bf16.msra.mxu0 0
        %822 = vmatpush.bf16.msra.mxu0 0
        %823 = vmatpush.bf16.msra.mxu0 0
        %824 = vmatpush.bf16.msra.mxu0 %v816
        %825 = vmatpush.bf16.msra.mxu0 %v807
        %826 = vmatmul.bf16.gmra.mxu0 %v812
        %v827 = vpop.f32.mrf.mxu0
        %v828 = vadd.f32 %v799, %v827
        %v829 = vpop.f32.mrf.mxu0
        %830 = vdwg.mxu0
        %s831 = sld [smem:[#allocation6]]
        %833 = vrot.lane.b32.xlu0 %v828, 96
        %v834 = vpop.permute.xlu0 %833
        %v836 = vadd.f32 %v828, %v834
        %v837 = vadd.f32 %v836, %v796
        %vm838 = vcmp.ge.f32.partialorder %v837, 0.0
        %v839 = vstv %s831
        %v840 = vmul.f32 %v839, %v837
        %v841 = vsel %vm838, %v837, %v840
        %v842 = vld [vmem:[%s7] sm:$0x1]
        %v844 = vperm.slane %v842, 0
        %v846 = vmul.f32 %v841, %v844
        %vm847 = vcmask 261120
        %v848 = vsel %vm847, %v846, 0.0
        %849 = vadd.xlane.f32.xlu0 %v848
        %v850 = vpop.xlane.xlu0 %849
        %s851 = sld [smem:[#allocation7]]
        %v852 = vstv %s851
        %v853 = vadd.f32 %v850, %v852
        %v854 = vsel %vm742, %v853, -1e+30
        // Predicated region
        $region109: #{tpu_custom_call.1} parent=91 // pred_check
          %p855 = pneg %p675
        $region110: #{tpu_custom_call.1} parent=91 // pred_check_branch
          %857 = sbr.rel (%p855) target = $region112
        $region111: #{tpu_custom_call.1} parent=91 // pred_region
          %v858 = vld [vmem:[#allocation3] sm:$0x1]
          %vm859 = vcmp.gt.f32.partialorder %v763, 0.0
          %v860 = vsel %vm859, %v854, -1e+30
          %vm861 = vcmask 97280
          %v862 = vsel %vm861, %v860, -inf
          %v863 = vrot.slane %v862, 4
          %v864 = vmax.f32 %v862, %v863
          %v865 = vrot.slane %v864, 2
          %v866 = vmax.f32 %v864, %v865
          %v867 = vrot.slane %v866, 1
          %v868 = vmax.f32 %v866, %v867
          %v869 = vmax.f32 %v858, %v868
          %v871 = vperm.slane %v869, 0
          %v873 = vmul.f32 %v763, %v871
          %v874 = vsel %vm861, %v873, 0.0
          %875 = vadd.xlane.f32.xlu0 %v874
          %v876 = vpop.xlane.xlu0 %875
          %v877 = vsub.f32 %v854, %v876
          %v878 = vmul.f32 %v877, 1.442695
          %v879 = vpow.pop %v878
          %v880 = vsel %vm742, %v879, 0.0
          %v881 = vld [vmem:[#allocation4] sm:$0x1]
          %v882 = vsub.f32 %v858, %v869
          %v883 = vmul.f32 %v882, 1.442695
          %v884 = vpow.pop %v883
          %v885 = vmul.f32 %v881, %v884
          %v886 = vmul.f32 %v763, %v880
          %v887 = vsel %vm861, %v886, 0.0
          %v888 = vrot.slane %v887, 4
          %v889 = vadd.f32 %v887, %v888
          %v890 = vrot.slane %v889, 2
          %v891 = vadd.f32 %v889, %v890
          %v892 = vrot.slane %v891, 1
          %v893 = vadd.f32 %v891, %v892
          %v894 = vadd.f32 %v885, %v893
          %vm895 = vcmask 90112
          %896 = vst.msk [vmem:[#allocation4] sm:$0x1] %vm895, %v894
          %897 = vst.msk [vmem:[#allocation3] sm:$0x1] %vm895, %v869
        $region112: #{tpu_custom_call.1} parent=91 // pred_fallthru
          _
        %p898 = scmp.eq.s32.totalorder %s38, 1
        // Predicated region
        $region113: #{tpu_custom_call.1} parent=91 // pred_check
          %p899 = pneg %p898
        $region114: #{tpu_custom_call.1} parent=91 // pred_check_branch
          %901 = sbr.rel (%p899) target = $region116
        $region115: #{tpu_custom_call.1} parent=91 // pred_region
          %902 = vrot.lane.b32.xlu0 %v807, 64
          %v903 = vpop.permute.xlu0 %902
          %904 = vrot.lane.b32.xlu0 %v808, 64
          %v905 = vpop.permute.xlu0 %904
          %907 = vrot.lane.b32.xlu0 %v799, 64
          %v908 = vpop.permute.xlu0 %907
          %v911 = vsel %vm814, %v905, 0
          %913 = vmatpush.bf16.msra.mxu0 0
          %914 = vmatpush.bf16.msra.mxu0 0
          %915 = vmatpush.bf16.msra.mxu0 0
          %916 = vmatpush.bf16.msra.mxu0 0
          %917 = vmatpush.bf16.msra.mxu0 0
          %918 = vmatpush.bf16.msra.mxu0 0
          %919 = vmatpush.bf16.msra.mxu0 %v911
          %920 = vmatpush.bf16.msra.mxu0 %v903
          %921 = vmatmul.bf16.gmra.mxu0 %v812
          %v922 = vpop.f32.mrf.mxu0
          %v923 = vadd.f32 %v908, %v922
          %v924 = vpop.f32.mrf.mxu0
          %925 = vdwg.mxu0
          %v926 = vld [vmem:[#allocation3] sm:$0x1]
          %v928 = vperm.slane %v926, 0
          %v930 = vmul.f32 %v763, %v928
          %vm931 = vcmask 97280
          %v932 = vsel %vm931, %v930, 0.0
          %933 = vadd.xlane.f32.xlu0 %v932
          %v934 = vpop.xlane.xlu0 %933
          %v935 = vld [vmem:[#allocation4] sm:$0x1]
          %v937 = vperm.slane %v935, 0
          %v939 = vmul.f32 %v763, %v937
          %v940 = vsel %vm931, %v939, 0.0
          %941 = vadd.xlane.f32.xlu0 %v940
          %v942 = vpop.xlane.xlu0 %941
          %v943 = vsub.f32 %v854, %v934
          %v944 = vmul.f32 %v943, 1.442695
          %v945 = vpow.pop %v944
          %v946 = vsel %vm742, %v945, 0.0
          %v947 = vrcp.pop %v942
          %v948 = vmul.f32 %v946, %v947
          %v949 = vmul.f32 %v948, %v796
          %951 = vrot.lane.b32.xlu0 %v923, 96
          %v952 = vpop.permute.xlu0 %951
          %v954 = vmul.f32 %v923, %v952
          %956 = vrot.lane.b32.xlu0 %v954, 32
          %v957 = vpop.permute.xlu0 %956
          %v959 = vmul.f32 %v949, %v957
          %v960 = vsel %vm742, 1, 0
          %vm961 = vcmp.eq.s32.totalorder %v960, 1
          %v962 = vsel %vm961, %v959, 0.0
          %v963 = vld [vmem:[%s673] sm:$0xff]
          %964 = vset.pattern.permute.xlu0 0
          %965 = vperm.xlu0 %964, %v963
          %v966 = vpop.permute.xlu0 %965
          %vm967 = vcmp.eq.s32.totalorder %v744, %v966
          %v968 = vsel %vm967, 1, 0
          %v969 = vcvt.s32.f32 %v968
          %v970 = vld [vmem:[#allocation5] sm:$0x3]
          %971 = vxpose.xlu0.b32.start [1/16] %v969, 128
          %972 = vxpose.xlu0.b32.cont [2/16] 0.0, 128
          %973 = vxpose.xlu0.b32.cont [3/16] 0.0, 128
          %974 = vxpose.xlu0.b32.cont [4/16] 0.0, 128
          %975 = vxpose.xlu0.b32.cont [5/16] 0.0, 128
          %976 = vxpose.xlu0.b32.cont [6/16] 0.0, 128
          %977 = vxpose.xlu0.b32.cont [7/16] 0.0, 128
          %978 = vxpose.xlu0.b32.cont [8/16] 0.0, 128
          %979 = vxpose.xlu0.b32.cont [9/16] 0.0, 128
          %980 = vxpose.xlu0.b32.cont [10/16] 0.0, 128
          %981 = vxpose.xlu0.b32.cont [11/16] 0.0, 128
          %982 = vxpose.xlu0.b32.cont [12/16] 0.0, 128
          %983 = vxpose.xlu0.b32.cont [13/16] 0.0, 128
          %984 = vxpose.xlu0.b32.cont [14/16] 0.0, 128
          %985 = vxpose.xlu0.b32.cont [15/16] 0.0, 128
          %986 = vxpose.xlu0.b32.end [16/16] 0.0, 128
          %v987 = vpop.trf.xlu0
          %v988 = vpop.trf.xlu0
          %v989 = vpop.trf.xlu0
          %v990 = vpop.trf.xlu0
          %v991 = vpop.trf.xlu0
          %v992 = vpop.trf.xlu0
          %v993 = vpop.trf.xlu0
          %v994 = vpop.trf.xlu0
          %v995 = vpop.trf.xlu0
          %v996 = vpop.trf.xlu0
          %v997 = vpop.trf.xlu0
          %v998 = vpop.trf.xlu0
          %v999 = vpop.trf.xlu0
          %v1000 = vpop.trf.xlu0
          %v1001 = vpop.trf.xlu0
          %v1002 = vpop.trf.xlu0
          %1004 = vrot.lane.b32.xlu0 %v962, 96
          %v1005 = vpop.permute.xlu0 %1004
          %v1008 = vsel %vm774, %v987, 0
          %1010 = vmatpush.msra.mxu0 0.0
          %1011 = vmatpush.msra.mxu0 0.0
          %1012 = vmatpush.msra.mxu0 0.0
          %1013 = vmatpush.msra.mxu0 0.0
          %1014 = vmatpush.msra.mxu0 0.0
          %1015 = vmatpush.msra.mxu0 0.0
          %1016 = vmatpush.msra.mxu0 0.0
          %1017 = vmatpush.msra.mxu0 0.0
          %1018 = vmatpush.msra.mxu0 0.0
          %1019 = vmatpush.msra.mxu0 0.0
          %1020 = vmatpush.msra.mxu0 0.0
          %1021 = vmatpush.msra.mxu0 0.0
          %1022 = vmatpush.msra.mxu0 0.0
          %1023 = vmatpush.msra.mxu0 0.0
          %1024 = vmatpush.msra.mxu0 0.0
          %1025 = vmatpush.msra.mxu0 %v1005
          %1026 = vmatmul.f32.gmra.mxu0 %v1008
          %v1027 = vpop.f32.mrf.mxu0
          %v1028 = vadd.f32 0.0, %v1027
          %1029 = vdwg.mxu0
          %v1030 = vadd.f32 %v970, %v1028
          %vm1031 = vcmask 254976
          %1032 = vst.msk [vmem:[#allocation5] sm:$0x3] %vm1031, %v1030
        $region116: #{tpu_custom_call.1} parent=91 // pred_fallthru
          _
        %p1033 = scmp.eq.s32.totalorder %s39, 2
        %p1034 = pnand %p898, %p1033
        %p1035 = pneg %p1034
        // Predicated region
        $region117: #{tpu_custom_call.1} parent=91 // pred_check
          _
        $region118: #{tpu_custom_call.1} parent=91 // pred_check_branch
          %1037 = sbr.rel (%p1034) target = $region120
        $region119: #{tpu_custom_call.1} parent=91 // pred_region
          %v1038 = vld [vmem:[#allocation5] sm:$0x3]
          %v1039 = vld [vmem:[#allocation8] sm:$0xff]
          %v1040 = vld [vmem:[#allocation8 + $0x8] sm:$0xff]
          %v1041 = vld [vmem:[#allocation8 + $0x10] sm:$0xff]
          %v1042 = vld [vmem:[#allocation8 + $0x18] sm:$0xff]
          %v1043 = vld [vmem:[#allocation8 + $0x20] sm:$0xff]
          %v1044 = vld [vmem:[#allocation8 + $0x28] sm:$0xff]
          %v1045 = vld [vmem:[#allocation8 + $0x30] sm:$0xff]
          %v1046 = vld [vmem:[#allocation8 + $0x38] sm:$0xff]
          %v1047 = vld [vmem:[%s9] sm:$0x3]
          %v1049 = vperm.slane %v1047, 0
          %v1050 = vperm.slane %v1047, 1
          %v1054 = vsel %vm847, %v1038, 0
          %1056 = vmatpush.msra.mxu0 0.0
          %1057 = vmatpush.msra.mxu0 0.0
          %1058 = vmatpush.msra.mxu0 0.0
          %1059 = vmatpush.msra.mxu0 0.0
          %1060 = vmatpush.msra.mxu0 0.0
          %1061 = vmatpush.msra.mxu0 0.0
          %1062 = vmatpush.msra.mxu0 0.0
          %1063 = vmatpush.msra.mxu0 0.0
          %1064 = vmatpush.msra.mxu0 0.0
          %1065 = vmatpush.msra.mxu0 0.0
          %1066 = vmatpush.msra.mxu0 0.0
          %1067 = vmatpush.msra.mxu0 0.0
          %1068 = vmatpush.msra.mxu0 %v1045
          %1069 = vmatpush.msra.mxu0 %v1043
          %1070 = vmatpush.msra.mxu0 %v1041
          %1071 = vmatpush.msra.mxu0 %v1039
          %1072 = vmatmul.f32.gmra.mxu0 %v1054
          %v1073 = vpop.f32.mrf.mxu0
          %v1074 = vadd.f32 %v1049, %v1073
          %1075 = vdwg.mxu0
          %1076 = vmatpush.msra.mxu0 0.0
          %1077 = vmatpush.msra.mxu0 0.0
          %1078 = vmatpush.msra.mxu0 0.0
          %1079 = vmatpush.msra.mxu0 0.0
          %1080 = vmatpush.msra.mxu0 0.0
          %1081 = vmatpush.msra.mxu0 0.0
          %1082 = vmatpush.msra.mxu0 0.0
          %1083 = vmatpush.msra.mxu0 0.0
          %1084 = vmatpush.msra.mxu0 0.0
          %1085 = vmatpush.msra.mxu0 0.0
          %1086 = vmatpush.msra.mxu0 0.0
          %1087 = vmatpush.msra.mxu0 0.0
          %1088 = vmatpush.msra.mxu0 %v1046
          %1089 = vmatpush.msra.mxu0 %v1044
          %1090 = vmatpush.msra.mxu0 %v1042
          %1091 = vmatpush.msra.mxu0 %v1040
          %1092 = vmatmul.f32.gmra.mxu0 %v1054
          %v1093 = vpop.f32.mrf.mxu0
          %v1094 = vadd.f32 %v1050, %v1093
          %1095 = vdwg.mxu0
          %vm1096 = vcmp.ge.f32.partialorder %v1074, 0.0
          %vm1097 = vcmp.ge.f32.partialorder %v1094, 0.0
          %v1098 = vmul.f32 %v1074, 0.01
          %v1099 = vmul.f32 %v1094, 0.01
          %v1100 = vsel %vm1096, %v1074, %v1098
          %v1101 = vsel %vm1097, %v1094, %v1099
          %v1102 = vmul.f32 %v1100, 0.999995
          %v1103 = vmul.f32 %v1101, 0.999995
          %v1104 = vld [vmem:[#allocation11] sm:$0xff]
          %v1105 = vld [vmem:[#allocation11 + $0x8] sm:$0xff]
          %v1106 = vld [vmem:[#allocation11 + $0x10] sm:$0xff]
          %v1107 = vld [vmem:[#allocation11 + $0x18] sm:$0xff]
          %v1108 = vld [vmem:[#allocation11 + $0x20] sm:$0xff]
          %v1109 = vld [vmem:[#allocation11 + $0x28] sm:$0xff]
          %v1110 = vld [vmem:[#allocation11 + $0x30] sm:$0xff]
          %v1111 = vld [vmem:[#allocation11 + $0x38] sm:$0xff]
          %v1112 = vld [vmem:[#allocation11 + $0x40] sm:$0xff]
          %v1113 = vld [vmem:[#allocation11 + $0x48] sm:$0xff]
          %v1114 = vld [vmem:[#allocation11 + $0x50] sm:$0xff]
          %v1115 = vld [vmem:[#allocation11 + $0x58] sm:$0xff]
          %v1116 = vld [vmem:[#allocation11 + $0x60] sm:$0xff]
          %v1117 = vld [vmem:[#allocation11 + $0x68] sm:$0xff]
          %v1118 = vld [vmem:[#allocation11 + $0x70] sm:$0xff]
          %v1119 = vld [vmem:[#allocation11 + $0x78] sm:$0xff]
          %v1120 = vld [vmem:[#allocation11 + $0x80] sm:$0xff]
          %v1121 = vld [vmem:[#allocation11 + $0x88] sm:$0xff]
          %v1122 = vld [vmem:[#allocation11 + $0x90] sm:$0xff]
          %v1123 = vld [vmem:[#allocation11 + $0x98] sm:$0xff]
          %v1124 = vld [vmem:[#allocation11 + $0xa0] sm:$0xff]
          %v1125 = vld [vmem:[#allocation11 + $0xa8] sm:$0xff]
          %v1126 = vld [vmem:[#allocation11 + $0xb0] sm:$0xff]
          %v1127 = vld [vmem:[#allocation11 + $0xb8] sm:$0xff]
          %v1128 = vld [vmem:[#allocation11 + $0xc0] sm:$0xff]
          %v1129 = vld [vmem:[#allocation11 + $0xc8] sm:$0xff]
          %v1130 = vld [vmem:[#allocation11 + $0xd0] sm:$0xff]
          %v1131 = vld [vmem:[#allocation11 + $0xd8] sm:$0xff]
          %v1132 = vld [vmem:[#allocation11 + $0xe0] sm:$0xff]
          %v1133 = vld [vmem:[#allocation11 + $0xe8] sm:$0xff]
          %v1134 = vld [vmem:[#allocation11 + $0xf0] sm:$0xff]
          %v1135 = vld [vmem:[#allocation11 + $0xf8] sm:$0xff]
          %v1136 = vld [vmem:[#allocation11 + $0x100] sm:$0xff]
          %v1137 = vld [vmem:[#allocation11 + $0x108] sm:$0xff]
          %v1138 = vld [vmem:[#allocation11 + $0x110] sm:$0xff]
          %v1139 = vld [vmem:[#allocation11 + $0x118] sm:$0xff]
          %v1140 = vld [vmem:[#allocation11 + $0x120] sm:$0xff]
          %v1141 = vld [vmem:[#allocation11 + $0x128] sm:$0xff]
          %v1142 = vld [vmem:[#allocation11 + $0x130] sm:$0xff]
          %v1143 = vld [vmem:[#allocation11 + $0x138] sm:$0xff]
          %v1144 = vld [vmem:[#allocation11 + $0x140] sm:$0xff]
          %v1145 = vld [vmem:[#allocation11 + $0x148] sm:$0xff]
          %v1146 = vld [vmem:[#allocation11 + $0x150] sm:$0xff]
          %v1147 = vld [vmem:[#allocation11 + $0x158] sm:$0xff]
          %v1148 = vld [vmem:[#allocation11 + $0x160] sm:$0xff]
          %v1149 = vld [vmem:[#allocation11 + $0x168] sm:$0xff]
          %v1150 = vld [vmem:[#allocation11 + $0x170] sm:$0xff]
          %v1151 = vld [vmem:[#allocation11 + $0x178] sm:$0xff]
          %v1152 = vld [vmem:[#allocation11 + $0x180] sm:$0xff]
          %v1153 = vld [vmem:[#allocation11 + $0x188] sm:$0xff]
          %v1154 = vld [vmem:[#allocation11 + $0x190] sm:$0xff]
          %v1155 = vld [vmem:[#allocation11 + $0x198] sm:$0xff]
          %v1156 = vld [vmem:[#allocation11 + $0x1a0] sm:$0xff]
          %v1157 = vld [vmem:[#allocation11 + $0x1a8] sm:$0xff]
          %v1158 = vld [vmem:[#allocation11 + $0x1b0] sm:$0xff]
          %v1159 = vld [vmem:[#allocation11 + $0x1b8] sm:$0xff]
          %v1160 = vld [vmem:[#allocation11 + $0x1c0] sm:$0xff]
          %v1161 = vld [vmem:[#allocation11 + $0x1c8] sm:$0xff]
          %v1162 = vld [vmem:[#allocation11 + $0x1d0] sm:$0xff]
          %v1163 = vld [vmem:[#allocation11 + $0x1d8] sm:$0xff]
          %v1164 = vld [vmem:[#allocation11 + $0x1e0] sm:$0xff]
          %v1165 = vld [vmem:[#allocation11 + $0x1e8] sm:$0xff]
          %v1166 = vld [vmem:[#allocation11 + $0x1f0] sm:$0xff]
          %v1167 = vld [vmem:[#allocation11 + $0x1f8] sm:$0xff]
          %v1168 = vld [vmem:[%s11] sm:$0x3]
          %v1170 = vperm.slane %v1168, 0
          %v1171 = vperm.slane %v1168, 1
          %1174 = vmatpush.msra.mxu0 %v1134
          %1175 = vmatpush.msra.mxu0 %v1132
          %1176 = vmatpush.msra.mxu0 %v1130
          %1177 = vmatpush.msra.mxu0 %v1128
          %1178 = vmatpush.msra.mxu0 %v1126
          %1179 = vmatpush.msra.mxu0 %v1124
          %1180 = vmatpush.msra.mxu0 %v1122
          %1181 = vmatpush.msra.mxu0 %v1120
          %1182 = vmatpush.msra.mxu0 %v1118
          %1183 = vmatpush.msra.mxu0 %v1116
          %1184 = vmatpush.msra.mxu0 %v1114
          %1185 = vmatpush.msra.mxu0 %v1112
          %1186 = vmatpush.msra.mxu0 %v1110
          %1187 = vmatpush.msra.mxu0 %v1108
          %1188 = vmatpush.msra.mxu0 %v1106
          %1189 = vmatpush.msra.mxu0 %v1104
          %1190 = vmatmul.f32.gmra.mxu0 %v1102
          %v1191 = vpop.f32.mrf.mxu0
          %v1192 = vadd.f32 %v1170, %v1191
          %1193 = vdwg.mxu0
          %1194 = vmatpush.msra.mxu0 %v1166
          %1195 = vmatpush.msra.mxu0 %v1164
          %1196 = vmatpush.msra.mxu0 %v1162
          %1197 = vmatpush.msra.mxu0 %v1160
          %1198 = vmatpush.msra.mxu0 %v1158
          %1199 = vmatpush.msra.mxu0 %v1156
          %1200 = vmatpush.msra.mxu0 %v1154
          %1201 = vmatpush.msra.mxu0 %v1152
          %1202 = vmatpush.msra.mxu0 %v1150
          %1203 = vmatpush.msra.mxu0 %v1148
          %1204 = vmatpush.msra.mxu0 %v1146
          %1205 = vmatpush.msra.mxu0 %v1144
          %1206 = vmatpush.msra.mxu0 %v1142
          %1207 = vmatpush.msra.mxu0 %v1140
          %1208 = vmatpush.msra.mxu0 %v1138
          %1209 = vmatpush.msra.mxu0 %v1136
          %1210 = vmatmul.f32.gmra.mxu0 %v1103
          %v1211 = vpop.f32.mrf.mxu0
          %v1212 = vadd.f32 %v1192, %v1211
          %1213 = vdwg.mxu0
          %1214 = vmatpush.msra.mxu0 %v1135
          %1215 = vmatpush.msra.mxu0 %v1133
          %1216 = vmatpush.msra.mxu0 %v1131
          %1217 = vmatpush.msra.mxu0 %v1129
          %1218 = vmatpush.msra.mxu0 %v1127
          %1219 = vmatpush.msra.mxu0 %v1125
          %1220 = vmatpush.msra.mxu0 %v1123
          %1221 = vmatpush.msra.mxu0 %v1121
          %1222 = vmatpush.msra.mxu0 %v1119
          %1223 = vmatpush.msra.mxu0 %v1117
          %1224 = vmatpush.msra.mxu0 %v1115
          %1225 = vmatpush.msra.mxu0 %v1113
          %1226 = vmatpush.msra.mxu0 %v1111
          %1227 = vmatpush.msra.mxu0 %v1109
          %1228 = vmatpush.msra.mxu0 %v1107
          %1229 = vmatpush.msra.mxu0 %v1105
          %1230 = vmatmul.f32.gmra.mxu0 %v1102
          %v1231 = vpop.f32.mrf.mxu0
          %v1232 = vadd.f32 %v1171, %v1231
          %1233 = vdwg.mxu0
          %1234 = vmatpush.msra.mxu0 %v1167
          %1235 = vmatpush.msra.mxu0 %v1165
          %1236 = vmatpush.msra.mxu0 %v1163
          %1237 = vmatpush.msra.mxu0 %v1161
          %1238 = vmatpush.msra.mxu0 %v1159
          %1239 = vmatpush.msra.mxu0 %v1157
          %1240 = vmatpush.msra.mxu0 %v1155
          %1241 = vmatpush.msra.mxu0 %v1153
          %1242 = vmatpush.msra.mxu0 %v1151
          %1243 = vmatpush.msra.mxu0 %v1149
          %1244 = vmatpush.msra.mxu0 %v1147
          %1245 = vmatpush.msra.mxu0 %v1145
          %1246 = vmatpush.msra.mxu0 %v1143
          %1247 = vmatpush.msra.mxu0 %v1141
          %1248 = vmatpush.msra.mxu0 %v1139
          %1249 = vmatpush.msra.mxu0 %v1137
          %1250 = vmatmul.f32.gmra.mxu0 %v1103
          %v1251 = vpop.f32.mrf.mxu0
          %v1252 = vadd.f32 %v1232, %v1251
          %1253 = vdwg.mxu0
          %vm1254 = vcmp.ge.f32.partialorder %v1212, 0.0
          %vm1255 = vcmp.ge.f32.partialorder %v1252, 0.0
          %v1256 = vmul.f32 %v1212, 0.01
          %v1257 = vmul.f32 %v1252, 0.01
          %v1258 = vsel %vm1254, %v1212, %v1256
          %v1259 = vsel %vm1255, %v1252, %v1257
          %v1260 = vmul.f32 %v1258, 0.999995
          %v1261 = vmul.f32 %v1259, 0.999995
          %v1262 = vld [vmem:[#allocation13] sm:$0xff]
          %v1263 = vld [vmem:[#allocation13 + $0x8] sm:$0xff]
          %v1264 = vld [vmem:[#allocation13 + $0x10] sm:$0xff]
          %v1265 = vld [vmem:[#allocation13 + $0x18] sm:$0xff]
          %v1266 = vld [vmem:[#allocation13 + $0x20] sm:$0xff]
          %v1267 = vld [vmem:[#allocation13 + $0x28] sm:$0xff]
          %v1268 = vld [vmem:[#allocation13 + $0x30] sm:$0xff]
          %v1269 = vld [vmem:[#allocation13 + $0x38] sm:$0xff]
          %v1270 = vld [vmem:[#allocation13 + $0x40] sm:$0xff]
          %v1271 = vld [vmem:[#allocation13 + $0x48] sm:$0xff]
          %v1272 = vld [vmem:[#allocation13 + $0x50] sm:$0xff]
          %v1273 = vld [vmem:[#allocation13 + $0x58] sm:$0xff]
          %v1274 = vld [vmem:[#allocation13 + $0x60] sm:$0xff]
          %v1275 = vld [vmem:[#allocation13 + $0x68] sm:$0xff]
          %v1276 = vld [vmem:[#allocation13 + $0x70] sm:$0xff]
          %v1277 = vld [vmem:[#allocation13 + $0x78] sm:$0xff]
          %v1278 = vld [vmem:[#allocation13 + $0x80] sm:$0xff]
          %v1279 = vld [vmem:[#allocation13 + $0x88] sm:$0xff]
          %v1280 = vld [vmem:[#allocation13 + $0x90] sm:$0xff]
          %v1281 = vld [vmem:[#allocation13 + $0x98] sm:$0xff]
          %v1282 = vld [vmem:[#allocation13 + $0xa0] sm:$0xff]
          %v1283 = vld [vmem:[#allocation13 + $0xa8] sm:$0xff]
          %v1284 = vld [vmem:[#allocation13 + $0xb0] sm:$0xff]
          %v1285 = vld [vmem:[#allocation13 + $0xb8] sm:$0xff]
          %v1286 = vld [vmem:[#allocation13 + $0xc0] sm:$0xff]
          %v1287 = vld [vmem:[#allocation13 + $0xc8] sm:$0xff]
          %v1288 = vld [vmem:[#allocation13 + $0xd0] sm:$0xff]
          %v1289 = vld [vmem:[#allocation13 + $0xd8] sm:$0xff]
          %v1290 = vld [vmem:[#allocation13 + $0xe0] sm:$0xff]
          %v1291 = vld [vmem:[#allocation13 + $0xe8] sm:$0xff]
          %v1292 = vld [vmem:[#allocation13 + $0xf0] sm:$0xff]
          %v1293 = vld [vmem:[#allocation13 + $0xf8] sm:$0xff]
          %v1294 = vld [vmem:[%s13] sm:$0x1]
          %v1296 = vperm.slane %v1294, 0
          %1298 = vmatpush.msra.mxu0 %v1277
          %1299 = vmatpush.msra.mxu0 %v1276
          %1300 = vmatpush.msra.mxu0 %v1275
          %1301 = vmatpush.msra.mxu0 %v1274
          %1302 = vmatpush.msra.mxu0 %v1273
          %1303 = vmatpush.msra.mxu0 %v1272
          %1304 = vmatpush.msra.mxu0 %v1271
          %1305 = vmatpush.msra.mxu0 %v1270
          %1306 = vmatpush.msra.mxu0 %v1269
          %1307 = vmatpush.msra.mxu0 %v1268
          %1308 = vmatpush.msra.mxu0 %v1267
          %1309 = vmatpush.msra.mxu0 %v1266
          %1310 = vmatpush.msra.mxu0 %v1265
          %1311 = vmatpush.msra.mxu0 %v1264
          %1312 = vmatpush.msra.mxu0 %v1263
          %1313 = vmatpush.msra.mxu0 %v1262
          %1314 = vmatmul.f32.gmra.mxu0 %v1260
          %v1315 = vpop.f32.mrf.mxu0
          %v1316 = vadd.f32 %v1296, %v1315
          %1317 = vdwg.mxu0
          %1318 = vmatpush.msra.mxu0 %v1293
          %1319 = vmatpush.msra.mxu0 %v1292
          %1320 = vmatpush.msra.mxu0 %v1291
          %1321 = vmatpush.msra.mxu0 %v1290
          %1322 = vmatpush.msra.mxu0 %v1289
          %1323 = vmatpush.msra.mxu0 %v1288
          %1324 = vmatpush.msra.mxu0 %v1287
          %1325 = vmatpush.msra.mxu0 %v1286
          %1326 = vmatpush.msra.mxu0 %v1285
          %1327 = vmatpush.msra.mxu0 %v1284
          %1328 = vmatpush.msra.mxu0 %v1283
          %1329 = vmatpush.msra.mxu0 %v1282
          %1330 = vmatpush.msra.mxu0 %v1281
          %1331 = vmatpush.msra.mxu0 %v1280
          %1332 = vmatpush.msra.mxu0 %v1279
          %1333 = vmatpush.msra.mxu0 %v1278
          %1334 = vmatmul.f32.gmra.mxu0 %v1261
          %v1335 = vpop.f32.mrf.mxu0
          %v1336 = vadd.f32 %v1316, %v1335
          %1337 = vdwg.mxu0
          %1338 = vst [vmem:[#allocation14] sm:$0x3] %v1336
        $region120: #{tpu_custom_call.1} parent=91 // pred_fallthru
          _
        // Predicated region
        $region121: #{tpu_custom_call.1} parent=91 // pred_check
          %p1339 = pneg %p457
        $region122: #{tpu_custom_call.1} parent=91 // pred_check_branch
          %1341 = sbr.rel (%p1339) target = $region124
        $region123: #{tpu_custom_call.1} parent=91 // pred_region
          %1343 = vsyncadd [#allocation10], 0
          %s1345 = sshll.u32 [#allocation14], 4
          %s1346 = int_to_ptr.vmem [resolvable:$true] %s1345
          %s1347 = sshll.u32 %s18, 4
          %s1348 = int_to_ptr.hbm [resolvable:$true] %s1347
          %1350 = dma.vmem_to_hbm [thread:$0]  %s1346, 32, %s1348, [#allocation10]
        $region124: #{tpu_custom_call.1} parent=91 // pred_fallthru
          _
        // Predicated region
        $region125: #{tpu_custom_call.1} parent=91 // pred_check
          %p1351 = pneg %p457
        $region126: #{tpu_custom_call.1} parent=91 // pred_check_branch
          %1353 = sbr.rel (%p1351) target = $region128
        $region127: #{tpu_custom_call.1} parent=91 // pred_region
          %1355 = dma.done [#allocation10], 32
        $region128: #{tpu_custom_call.1} parent=91 // pred_fallthru
          _
      $region92: #{tpu_custom_call.1} parent=5 // pred_fallthru
        _
      %p1356 = scmp.le.s32.totalorder 2, %s29
      // Predicated region
      $region129: #{tpu_custom_call.1} parent=5 // pred_check
        %p1357 = pneg %p1356
      $region130: #{tpu_custom_call.1} parent=5 // pred_check_branch
        %1359 = sbr.rel (%p1357) target = $region132
      $region131: #{tpu_custom_call.1} parent=5 // pred_region
        %s1360 = ssub.s32 %s29, 2
      $region132: #{tpu_custom_call.1} parent=5 // pred_fallthru
        _
    $region6: #{tpu_custom_call.1} parent=1 // loop_footer
      %s33 = sadd.s32 1, %s29
    $region7: #{tpu_custom_call.1} parent=1 // loop_footer_branch
      %28 = sbr.rel target = $region3
    $region8: #{tpu_custom_call.1} parent=1 // loop_exit
      _
    %1361 = vsyncpa [#allocation9], 1
    %s1362 = scalar_lea.sflag [#allocation9], 1
    %1363 = vsyncpa %s1362, 1
    %1364 = vsyncpa [#allocation12], 1
    %1365 = vsyncpa [#allocation10], 1
    %s1366 = scalar_lea.sflag [#allocation10], 1
    %1367 = vsyncpa %s1366, 1

</llo_original>
